<compile_context>
chip_gen: v5e
topology: v5e:2x2
jax: 0.10.0
libtpu: 0.0.40
codegen_flags: <defaults>
</compile_context>

<pallas_src>
import jax
import jax.numpy as jnp
from jax.experimental import pallas as pl
from jax.experimental.pallas import tpu as pltpu

# ----------------------------- config (small synthetic backbone) -----------------
EMBED_DIM = 32
NUM_HEADS = 4
HEAD_DIM = EMBED_DIM // NUM_HEADS
PATCH = (2, 4, 4)          # PatchEmbed3D patch size (t, h, w)
WINDOW = (2, 4, 4)         # 3D attention window (== post-patch grid here -> 1 window)
MLP_RATIO = 4
LN_EPS = 1e-5
IN_CHANS = 3
N_TOK = WINDOW[0] * WINDOW[1] * WINDOW[2]     # tokens per window (= per batch here)

# Row indices inside the packed (16, 128) parameter-vector slab.
(R_PATCH_B, R_PE_G, R_PE_B, R_LN1_G, R_LN1_B, R_QKV_B, R_PROJ_B,
 R_LN2_G, R_LN2_B, R_FC1_B, R_FC2_B, R_FLN_G, R_FLN_B) = range(13)
VEC_ROWS = 16              # padded to a multiple of 8 sublanes


# ----------------------------- kernel helpers -------------------------------------
def _ln(x, g, b):
    mu = jnp.mean(x, axis=-1, keepdims=True)
    var = jnp.mean(jnp.square(x - mu), axis=-1, keepdims=True)
    return (x - mu) * jax.lax.rsqrt(var + LN_EPS) * g + b


def _gelu_exact(x):
    # PyTorch nn.GELU default (exact, erf-based)
    return 0.5 * x * (1.0 + jax.lax.erf(x * (2.0 ** -0.5)))


# ----------------------------- single fused Pallas kernel -------------------------
def fused_video_swin_kernel(
    xp_ref,        # (N, Kpad) bf16   im2col'd patches of ONE batch window
    pw_ref,        # (Kpad, C) bf16   PatchEmbed3D conv-as-matmul weight
    qkvw_ref,      # (C, 3C)   bf16   fused qkv projection (scale folded into q cols)
    projw_ref,     # (nH, HD, C) f32  attention output projection, split per head
    fc1w_ref,      # (C, 4C)   bf16
    fc2w_ref,      # (4C, C)   bf16
    bias_ref,      # (nH, N, N) f32   relative-position bias per head
    vec_ref,       # (16, 128) f32    packed gamma/beta/bias slab
    o_ref,         # (N, C)    f32    output tokens
):
    f32 = jnp.float32
    bf16 = jnp.bfloat16
    C = EMBED_DIM
    HD = HEAD_DIM

    def vrow(i, width=C):
        # static row slice of the packed parameter slab -> (1, width), broadcasts
        return vec_ref[i:i + 1, 0:width]

    # ---- PatchEmbed3D: Conv3d(kernel==stride) as one MXU matmul + LayerNorm ------
    y = jnp.dot(xp_ref[...], pw_ref[...], preferred_element_type=f32) + vrow(R_PATCH_B)
    x = _ln(y, vrow(R_PE_G), vrow(R_PE_B))                           # (N, C) f32

    # ---- SwinTransformerBlock3D :: W-MSA (shift=0, one window per grid step) -----
    h = _ln(x, vrow(R_LN1_G), vrow(R_LN1_B))
    qkv = jnp.dot(h.astype(bf16), qkvw_ref[...],
                  preferred_element_type=f32) + vrow(R_QKV_B, 3 * C)  # (N, 3C)

    # Per-head attention, statically unrolled (nH = 4).  Each head is a pair of
    # small 2-D matmuls + a softmax; the relative-position bias is read with a
    # static leading index.  No (G,G) score/bias tensors, no duplication matmuls.
    attn = None
    for hd in range(NUM_HEADS):
        q_h = qkv[:, hd * HD:(hd + 1) * HD].astype(bf16)             # (N, HD)
        k_h = qkv[:, C + hd * HD:C + (hd + 1) * HD].astype(bf16)
        v_h = qkv[:, 2 * C + hd * HD:2 * C + (hd + 1) * HD].astype(bf16)

        s = jax.lax.dot_general(q_h, k_h, (((1,), (1,)), ((), ())),
                                preferred_element_type=f32)          # (N, N)
        s = s + bias_ref[hd]
        s = s - jnp.max(s, axis=-1, keepdims=True)
        p = jnp.exp(s)
        p = p * pl.reciprocal(jnp.sum(p, axis=-1, keepdims=True), approx=True)

        o_h = jnp.dot(p.astype(bf16), v_h, preferred_element_type=f32)   # (N, HD)
        # Partial output projection: sum_h o_h @ W_proj[h*HD:(h+1)*HD, :]
        part = jnp.dot(o_h.astype(bf16), projw_ref[hd].astype(bf16),
                       preferred_element_type=f32)                   # (N, C)
        attn = part if attn is None else attn + part

    attn = attn + vrow(R_PROJ_B)
    x = x + attn                                                     # residual (drop_path = 0)

    # ---- SwinTransformerBlock3D :: MLP --------------------------------------------
    h2 = _ln(x, vrow(R_LN2_G), vrow(R_LN2_B))
    h2 = jnp.dot(h2.astype(bf16), fc1w_ref[...],
                 preferred_element_type=f32) + vrow(R_FC1_B, MLP_RATIO * C)
    h2 = _gelu_exact(h2)
    h2 = jnp.dot(h2.astype(bf16), fc2w_ref[...],
                 preferred_element_type=f32) + vrow(R_FC2_B)
    x = x + h2

    # ---- final LayerNorm (SwinTransformer3D.norm) ----------------------------------
    o_ref[...] = _ln(x, vrow(R_FLN_G), vrow(R_FLN_B))


# ----------------------------- parameter setup (init-time glue) -------------------
def compute_rel_pos_index(window_size):
    wd, wh, ww = window_size
    coords = jnp.stack(jnp.meshgrid(jnp.arange(wd), jnp.arange(wh), jnp.arange(ww),
                                    indexing="ij"))                # (3, Wd, Wh, Ww)
    coords_flat = coords.reshape(3, -1)                            # (3, N)
    rel = coords_flat[:, :, None] - coords_flat[:, None, :]        # (3, N, N)
    rel = rel.transpose(1, 2, 0)                                   # (N, N, 3)
    rel = rel.at[:, :, 0].add(wd - 1)
    rel = rel.at[:, :, 1].add(wh - 1)
    rel = rel.at[:, :, 2].add(ww - 1)
    rel = rel.at[:, :, 0].multiply((2 * wh - 1) * (2 * ww - 1))
    rel = rel.at[:, :, 1].multiply(2 * ww - 1)
    return rel.sum(-1)                                             # (N, N) int32


def init_params(key):
    C = EMBED_DIM
    K = IN_CHANS * PATCH[0] * PATCH[1] * PATCH[2]
    Kpad = ((K + 127) // 128) * 128
    N = N_TOK
    nrel = (2 * WINDOW[0] - 1) * (2 * WINDOW[1] - 1) * (2 * WINDOW[2] - 1)
    keys = jax.random.split(key, 6)

    def nrm(k, shape):
        return (0.02 * jax.random.normal(k, shape)).astype(jnp.float32)

    ones = lambda s: jnp.ones(s, jnp.float32)
    zeros = lambda s: jnp.zeros(s, jnp.float32)
    bf16 = lambda a: a.astype(jnp.bfloat16)

    # Conv3d-as-matmul weight, zero padded along K to a full 128-lane tile.
    patch_w = jnp.zeros((Kpad, C), jnp.float32).at[:K].set(nrm(keys[0], (K, C)))

    # Fused QKV projection; attention scale folded into the q columns/bias at init.
    scale = HEAD_DIM ** -0.5
    qkv_w = nrm(keys[1], (C, 3 * C))
    qkv_w = qkv_w.at[:, :C].multiply(scale)
    qkv_b = zeros((3 * C,))
    qkv_b = qkv_b.at[:C].multiply(scale)

    # Relative position bias gathered once here (not per forward) as (nH, N, N).
    rel_table = nrm(keys[2], (nrel, NUM_HEADS))
    rel_index = compute_rel_pos_index(WINDOW)
    rel_bias = rel_table[rel_index.reshape(-1)].reshape(N, N, NUM_HEADS)
    rel_bias = rel_bias.transpose(2, 0, 1).astype(jnp.float32)     # (nH, N, N)

    # Output projection split per head: row block h multiplies head h's channels
    # (equivalent to concat-of-heads followed by the full (C, C) projection).
    proj_w = nrm(keys[3], (C, C)).reshape(NUM_HEADS, HEAD_DIM, C)

    fc1_w = nrm(keys[4], (C, MLP_RATIO * C))
    fc2_w = nrm(keys[5], (MLP_RATIO * C, C))

    # Pack all tiny per-channel vectors into one (16, 128) f32 slab (one DMA).
    def pad_row(v):
        v = jnp.asarray(v, jnp.float32).reshape(-1)
        return jnp.pad(v, (0, 128 - v.shape[0]))

    rows = [
        zeros((C,)),                 # R_PATCH_B
        ones((C,)), zeros((C,)),     # R_PE_G, R_PE_B
        ones((C,)), zeros((C,)),     # R_LN1_G, R_LN1_B
        qkv_b,                       # R_QKV_B  (3C = 96 wide)
        zeros((C,)),                 # R_PROJ_B
        ones((C,)), zeros((C,)),     # R_LN2_G, R_LN2_B
        zeros((MLP_RATIO * C,)),     # R_FC1_B  (128 wide)
        zeros((C,)),                 # R_FC2_B
        ones((C,)), zeros((C,)),     # R_FLN_G, R_FLN_B
    ]
    vec = jnp.stack([pad_row(r) for r in rows]
                    + [jnp.zeros((128,), jnp.float32)] * (VEC_ROWS - len(rows)))

    return dict(
        patch_w=bf16(patch_w),
        qkv_w=bf16(qkv_w),
        proj_w=proj_w,               # f32 (nH, HD, C), cast in-kernel
        fc1_w=bf16(fc1_w),
        fc2_w=bf16(fc2_w),
        rel_bias=rel_bias,
        vec=vec,
    )


# ----------------------------- forward (wrapper) ----------------------------------
@jax.jit
def video_swin_forward(x, params):
    B, Cin, T, H, W = x.shape
    pt, ph, pw = PATCH
    D, Hp, Wp = T // pt, H // ph, W // pw
    C = EMBED_DIM
    N = D * Hp * Wp
    M = B * N
    K = Cin * pt * ph * pw
    Kpad = params["patch_w"].shape[0]
    assert N == N_TOK, "toy backbone: window must equal the whole post-patch grid"

    # im2col for Conv3d(kernel==stride): cast to bf16 FIRST (halves relayout bytes),
    # patch flattened in (cin, kt, kh, kw) order, zero padded on K to 128 lanes.
    xp = x.astype(jnp.bfloat16).reshape(B, Cin, D, pt, Hp, ph, Wp, pw)
    xp = xp.transpose(0, 2, 4, 6, 1, 3, 5, 7).reshape(M, K)
    xp = jnp.pad(xp, ((0, 0), (0, Kpad - K)))

    out = pl.pallas_call(
        fused_video_swin_kernel,
        out_shape=jax.ShapeDtypeStruct((M, C), jnp.float32),
        grid=(B,),
        in_specs=[
            pl.BlockSpec((N, Kpad), lambda b: (b, 0)),                       # xp
            pl.BlockSpec((Kpad, C), lambda b: (0, 0)),                       # patch_w
            pl.BlockSpec((C, 3 * C), lambda b: (0, 0)),                      # qkv_w
            pl.BlockSpec((NUM_HEADS, HEAD_DIM, C), lambda b: (0, 0, 0)),     # proj_w
            pl.BlockSpec((C, MLP_RATIO * C), lambda b: (0, 0)),              # fc1_w
            pl.BlockSpec((MLP_RATIO * C, C), lambda b: (0, 0)),              # fc2_w
            pl.BlockSpec((NUM_HEADS, N, N), lambda b: (0, 0, 0)),            # rel_bias
            pl.BlockSpec((VEC_ROWS, 128), lambda b: (0, 0)),                 # vec slab
        ],
        out_specs=pl.BlockSpec((N, C), lambda b: (b, 0)),
        compiler_params=pltpu.CompilerParams(
            dimension_semantics=("parallel",),        # shards batch windows over v7x's 2 TCs
            vmem_limit_bytes=32 * 1024 * 1024,        # explicit (v5e default is 16 MiB)
        ),
    )(
        xp,
        params["patch_w"], params["qkv_w"], params["proj_w"],
        params["fc1_w"], params["fc2_w"], params["rel_bias"], params["vec"],
    )

    # rearrange 'n d h w c -> n c d h w' (Video Swin backbone output convention)
    return out.reshape(B, D, Hp, Wp, C).transpose(0, 4, 1, 2, 3)


# TODO(synk): dropout / DropPath are identity in eval mode and are omitted; multi-stage
# PatchMerging, shifted windows and the multi-window attention mask are not
# instantiated for this small synthetic backbone (window == whole grid, shift=0).
# TODO(synk): at production sizes (C>=96, many windows) pad channels to 128-multiples,
# switch the per-head loop to a batched (B*nH, N, HEAD_DIM) einsum, and re-derive
# tile sizes against v7x's 64 MiB VMEM.

if __name__ == "__main__":
    key = jax.random.PRNGKey(0)
    k_x, k_p = jax.random.split(key)
    x = jax.random.normal(k_x, (2, IN_CHANS, 4, 16, 16), jnp.float32)   # (B, Cin, T, H, W)
    params = init_params(k_p)

    out = video_swin_forward(x, params)
    out = jax.block_until_ready(out)
    assert out.shape == (2, EMBED_DIM, 2, 4, 4), out.shape
    assert bool(jnp.all(jnp.isfinite(out)))
    print("KERNEL_OK")
</pallas_src>

<mosaic_0001>
module attributes {stable_mosaic.version = 11 : i64} {
  func.func @fused_video_swin_kernel(%arg0: i32, %arg1: memref<32x128xbf16, #tpu.memory_space<vmem>>, %arg2: memref<128x32xbf16, #tpu.memory_space<vmem>>, %arg3: memref<32x96xbf16, #tpu.memory_space<vmem>>, %arg4: memref<4x8x32xf32, #tpu.memory_space<vmem>>, %arg5: memref<32x128xbf16, #tpu.memory_space<vmem>>, %arg6: memref<128x32xbf16, #tpu.memory_space<vmem>>, %arg7: memref<4x32x32xf32, #tpu.memory_space<vmem>>, %arg8: memref<16x128xf32, #tpu.memory_space<vmem>>, %arg9: memref<32x32xf32, #tpu.memory_space<vmem>>) attributes {dimension_semantics = [#tpu.dimension_semantics<parallel>], iteration_bounds = array<i64: 2>, scalar_prefetch = 0 : i64, scratch_operands = 0 : i64, tpu.core_type = #tpu.core_type<tc>, window_params = [{transform_indices = @transform_0, window_bounds = array<i64: 32, 128>}, {pipeline_mode = #tpu.pipeline_mode<synchronous>, transform_indices = @transform_1, window_bounds = array<i64: 128, 32>}, {pipeline_mode = #tpu.pipeline_mode<synchronous>, transform_indices = @transform_2, window_bounds = array<i64: 32, 96>}, {pipeline_mode = #tpu.pipeline_mode<synchronous>, transform_indices = @transform_3, window_bounds = array<i64: 4, 8, 32>}, {pipeline_mode = #tpu.pipeline_mode<synchronous>, transform_indices = @transform_4, window_bounds = array<i64: 32, 128>}, {pipeline_mode = #tpu.pipeline_mode<synchronous>, transform_indices = @transform_5, window_bounds = array<i64: 128, 32>}, {pipeline_mode = #tpu.pipeline_mode<synchronous>, transform_indices = @transform_6, window_bounds = array<i64: 4, 32, 32>}, {pipeline_mode = #tpu.pipeline_mode<synchronous>, transform_indices = @transform_7, window_bounds = array<i64: 16, 128>}, {transform_indices = @transform_8, window_bounds = array<i64: 32, 32>}]} {
    %c0 = arith.constant 0 : index
    %c0_0 = arith.constant 0 : index
    %0 = vector.load %arg1[%c0, %c0_0] : memref<32x128xbf16, #tpu.memory_space<vmem>>, vector<32x128xbf16>
    %c0_1 = arith.constant 0 : index
    %c0_2 = arith.constant 0 : index
    %1 = vector.load %arg2[%c0_1, %c0_2] : memref<128x32xbf16, #tpu.memory_space<vmem>>, vector<128x32xbf16>
    %cst = arith.constant dense<0.000000e+00> : vector<32x32xf32>
    %2 = tpu.matmul %0, %1, %cst {dimension_numbers = #tpu.dot_dimension_numbers<[1], [0], [0], [1], [0, 0, 1, 1], [], []>} : vector<32x128xbf16>, vector<128x32xbf16>, vector<32x32xf32> -> vector<32x32xf32>
    %c0_3 = arith.constant 0 : index
    %c0_4 = arith.constant 0 : index
    %3 = vector.load %arg8[%c0_3, %c0_4] : memref<16x128xf32, #tpu.memory_space<vmem>>, vector<1x32xf32>
    %4 = vector.broadcast %3 : vector<1x32xf32> to vector<32x32xf32>
    %5 = arith.addf %2, %4 : vector<32x32xf32>
    %c1 = arith.constant 1 : index
    %c0_5 = arith.constant 0 : index
    %6 = vector.load %arg8[%c1, %c0_5] : memref<16x128xf32, #tpu.memory_space<vmem>>, vector<1x32xf32>
    %c2 = arith.constant 2 : index
    %c0_6 = arith.constant 0 : index
    %7 = vector.load %arg8[%c2, %c0_6] : memref<16x128xf32, #tpu.memory_space<vmem>>, vector<1x32xf32>
    %cst_7 = arith.constant dense<0.000000e+00> : vector<32xf32>
    %8 = vector.multi_reduction <add>, %5, %cst_7 [1] : vector<32x32xf32> to vector<32xf32>
    %9 = vector.shape_cast %8 : vector<32xf32> to vector<32x1xf32>
    %cst_8 = arith.constant 3.200000e+01 : f32
    %10 = vector.broadcast %cst_8 : f32 to vector<32x1xf32>
    %11 = arith.divf %9, %10 : vector<32x1xf32>
    %12 = vector.broadcast %11 : vector<32x1xf32> to vector<32x32xf32>
    %13 = arith.subf %5, %12 : vector<32x32xf32>
    %14 = arith.mulf %13, %13 : vector<32x32xf32>
    %cst_9 = arith.constant dense<0.000000e+00> : vector<32xf32>
    %15 = vector.multi_reduction <add>, %14, %cst_9 [1] : vector<32x32xf32> to vector<32xf32>
    %16 = vector.shape_cast %15 : vector<32xf32> to vector<32x1xf32>
    %cst_10 = arith.constant 3.200000e+01 : f32
    %17 = vector.broadcast %cst_10 : f32 to vector<32x1xf32>
    %18 = arith.divf %16, %17 : vector<32x1xf32>
    %19 = vector.broadcast %11 : vector<32x1xf32> to vector<32x32xf32>
    %20 = arith.subf %5, %19 : vector<32x32xf32>
    %cst_11 = arith.constant 9.99999974E-6 : f32
    %21 = vector.broadcast %cst_11 : f32 to vector<32x1xf32>
    %22 = arith.addf %18, %21 : vector<32x1xf32>
    %23 = math.rsqrt %22 : vector<32x1xf32>
    %24 = vector.broadcast %23 : vector<32x1xf32> to vector<32x32xf32>
    %25 = arith.mulf %20, %24 : vector<32x32xf32>
    %26 = vector.broadcast %6 : vector<1x32xf32> to vector<32x32xf32>
    %27 = arith.mulf %25, %26 : vector<32x32xf32>
    %28 = vector.broadcast %7 : vector<1x32xf32> to vector<32x32xf32>
    %29 = arith.addf %27, %28 : vector<32x32xf32>
    %c3 = arith.constant 3 : index
    %c0_12 = arith.constant 0 : index
    %30 = vector.load %arg8[%c3, %c0_12] : memref<16x128xf32, #tpu.memory_space<vmem>>, vector<1x32xf32>
    %c4 = arith.constant 4 : index
    %c0_13 = arith.constant 0 : index
    %31 = vector.load %arg8[%c4, %c0_13] : memref<16x128xf32, #tpu.memory_space<vmem>>, vector<1x32xf32>
    %cst_14 = arith.constant dense<0.000000e+00> : vector<32xf32>
    %32 = vector.multi_reduction <add>, %29, %cst_14 [1] : vector<32x32xf32> to vector<32xf32>
    %33 = vector.shape_cast %32 : vector<32xf32> to vector<32x1xf32>
    %cst_15 = arith.constant 3.200000e+01 : f32
    %34 = vector.broadcast %cst_15 : f32 to vector<32x1xf32>
    %35 = arith.divf %33, %34 : vector<32x1xf32>
    %36 = vector.broadcast %35 : vector<32x1xf32> to vector<32x32xf32>
    %37 = arith.subf %29, %36 : vector<32x32xf32>
    %38 = arith.mulf %37, %37 : vector<32x32xf32>
    %cst_16 = arith.constant dense<0.000000e+00> : vector<32xf32>
    %39 = vector.multi_reduction <add>, %38, %cst_16 [1] : vector<32x32xf32> to vector<32xf32>
    %40 = vector.shape_cast %39 : vector<32xf32> to vector<32x1xf32>
    %cst_17 = arith.constant 3.200000e+01 : f32
    %41 = vector.broadcast %cst_17 : f32 to vector<32x1xf32>
    %42 = arith.divf %40, %41 : vector<32x1xf32>
    %43 = vector.broadcast %35 : vector<32x1xf32> to vector<32x32xf32>
    %44 = arith.subf %29, %43 : vector<32x32xf32>
    %cst_18 = arith.constant 9.99999974E-6 : f32
    %45 = vector.broadcast %cst_18 : f32 to vector<32x1xf32>
    %46 = arith.addf %42, %45 : vector<32x1xf32>
    %47 = math.rsqrt %46 : vector<32x1xf32>
    %48 = vector.broadcast %47 : vector<32x1xf32> to vector<32x32xf32>
    %49 = arith.mulf %44, %48 : vector<32x32xf32>
    %50 = vector.broadcast %30 : vector<1x32xf32> to vector<32x32xf32>
    %51 = arith.mulf %49, %50 : vector<32x32xf32>
    %52 = vector.broadcast %31 : vector<1x32xf32> to vector<32x32xf32>
    %53 = arith.addf %51, %52 : vector<32x32xf32>
    %54 = arith.truncf %53 : vector<32x32xf32> to vector<32x32xbf16>
    %c0_19 = arith.constant 0 : index
    %c0_20 = arith.constant 0 : index
    %55 = vector.load %arg3[%c0_19, %c0_20] : memref<32x96xbf16, #tpu.memory_space<vmem>>, vector<32x96xbf16>
    %cst_21 = arith.constant dense<0.000000e+00> : vector<32x96xf32>
    %56 = tpu.matmul %54, %55, %cst_21 {dimension_numbers = #tpu.dot_dimension_numbers<[1], [0], [0], [1], [0, 0, 1, 1], [], []>} : vector<32x32xbf16>, vector<32x96xbf16>, vector<32x96xf32> -> vector<32x96xf32>
    %c5 = arith.constant 5 : index
    %c0_22 = arith.constant 0 : index
    %57 = vector.load %arg8[%c5, %c0_22] : memref<16x128xf32, #tpu.memory_space<vmem>>, vector<1x96xf32>
    %58 = vector.broadcast %57 : vector<1x96xf32> to vector<32x96xf32>
    %59 = arith.addf %56, %58 : vector<32x96xf32>
    %60 = vector.extract_strided_slice %59 {offsets = [0, 0], sizes = [32, 8], strides = [1, 1]} : vector<32x96xf32> to vector<32x8xf32>
    %61 = arith.truncf %60 : vector<32x8xf32> to vector<32x8xbf16>
    %62 = vector.extract_strided_slice %59 {offsets = [0, 32], sizes = [32, 8], strides = [1, 1]} : vector<32x96xf32> to vector<32x8xf32>
    %63 = arith.truncf %62 : vector<32x8xf32> to vector<32x8xbf16>
    %64 = vector.extract_strided_slice %59 {offsets = [0, 64], sizes = [32, 8], strides = [1, 1]} : vector<32x96xf32> to vector<32x8xf32>
    %65 = arith.truncf %64 : vector<32x8xf32> to vector<32x8xbf16>
    %cst_23 = arith.constant dense<0.000000e+00> : vector<32x32xf32>
    %66 = tpu.matmul %61, %63, %cst_23 {dimension_numbers = #tpu.dot_dimension_numbers<[1], [1], [0], [0], [0, 0, 1, 0], [], []>} : vector<32x8xbf16>, vector<32x8xbf16>, vector<32x32xf32> -> vector<32x32xf32>
    %c0_24 = arith.constant 0 : index
    %c0_25 = arith.constant 0 : index
    %c0_26 = arith.constant 0 : index
    %67 = vector.load %arg7[%c0_24, %c0_25, %c0_26] : memref<4x32x32xf32, #tpu.memory_space<vmem>>, vector<1x32x32xf32>
    %68 = vector.shape_cast %67 : vector<1x32x32xf32> to vector<32x32xf32>
    %69 = arith.addf %66, %68 : vector<32x32xf32>
    %cst_27 = arith.constant dense<0xFF800000> : vector<32xf32>
    %70 = vector.multi_reduction <maximumf>, %69, %cst_27 [1] : vector<32x32xf32> to vector<32xf32>
    %71 = vector.shape_cast %70 : vector<32xf32> to vector<32x1xf32>
    %72 = vector.broadcast %71 : vector<32x1xf32> to vector<32x32xf32>
    %73 = arith.subf %69, %72 : vector<32x32xf32>
    %74 = math.exp %73 : vector<32x32xf32>
    %cst_28 = arith.constant dense<0.000000e+00> : vector<32xf32>
    %75 = vector.multi_reduction <add>, %74, %cst_28 [1] : vector<32x32xf32> to vector<32xf32>
    %76 = vector.shape_cast %75 : vector<32xf32> to vector<32x1xf32>
    %77 = tpu.reciprocal %76 {approx = true} : vector<32x1xf32> -> vector<32x1xf32>
    %78 = vector.broadcast %77 : vector<32x1xf32> to vector<32x32xf32>
    %79 = arith.mulf %74, %78 : vector<32x32xf32>
    %80 = arith.truncf %79 : vector<32x32xf32> to vector<32x32xbf16>
    %cst_29 = arith.constant dense<0.000000e+00> : vector<32x8xf32>
    %81 = tpu.matmul %80, %65, %cst_29 {dimension_numbers = #tpu.dot_dimension_numbers<[1], [0], [0], [1], [0, 0, 1, 1], [], []>} : vector<32x32xbf16>, vector<32x8xbf16>, vector<32x8xf32> -> vector<32x8xf32>
    %82 = arith.truncf %81 : vector<32x8xf32> to vector<32x8xbf16>
    %c0_30 = arith.constant 0 : index
    %c0_31 = arith.constant 0 : index
    %c0_32 = arith.constant 0 : index
    %83 = vector.load %arg4[%c0_30, %c0_31, %c0_32] : memref<4x8x32xf32, #tpu.memory_space<vmem>>, vector<1x8x32xf32>
    %84 = vector.shape_cast %83 : vector<1x8x32xf32> to vector<8x32xf32>
    %85 = arith.truncf %84 : vector<8x32xf32> to vector<8x32xbf16>
    %cst_33 = arith.constant dense<0.000000e+00> : vector<32x32xf32>
    %86 = tpu.matmul %82, %85, %cst_33 {dimension_numbers = #tpu.dot_dimension_numbers<[1], [0], [0], [1], [0, 0, 1, 1], [], []>} : vector<32x8xbf16>, vector<8x32xbf16>, vector<32x32xf32> -> vector<32x32xf32>
    %87 = vector.extract_strided_slice %59 {offsets = [0, 8], sizes = [32, 8], strides = [1, 1]} : vector<32x96xf32> to vector<32x8xf32>
    %88 = arith.truncf %87 : vector<32x8xf32> to vector<32x8xbf16>
    %89 = vector.extract_strided_slice %59 {offsets = [0, 40], sizes = [32, 8], strides = [1, 1]} : vector<32x96xf32> to vector<32x8xf32>
    %90 = arith.truncf %89 : vector<32x8xf32> to vector<32x8xbf16>
    %91 = vector.extract_strided_slice %59 {offsets = [0, 72], sizes = [32, 8], strides = [1, 1]} : vector<32x96xf32> to vector<32x8xf32>
    %92 = arith.truncf %91 : vector<32x8xf32> to vector<32x8xbf16>
    %cst_34 = arith.constant dense<0.000000e+00> : vector<32x32xf32>
    %93 = tpu.matmul %88, %90, %cst_34 {dimension_numbers = #tpu.dot_dimension_numbers<[1], [1], [0], [0], [0, 0, 1, 0], [], []>} : vector<32x8xbf16>, vector<32x8xbf16>, vector<32x32xf32> -> vector<32x32xf32>
    %c1_35 = arith.constant 1 : index
    %c0_36 = arith.constant 0 : index
    %c0_37 = arith.constant 0 : index
    %94 = vector.load %arg7[%c1_35, %c0_36, %c0_37] : memref<4x32x32xf32, #tpu.memory_space<vmem>>, vector<1x32x32xf32>
    %95 = vector.shape_cast %94 : vector<1x32x32xf32> to vector<32x32xf32>
    %96 = arith.addf %93, %95 : vector<32x32xf32>
    %cst_38 = arith.constant dense<0xFF800000> : vector<32xf32>
    %97 = vector.multi_reduction <maximumf>, %96, %cst_38 [1] : vector<32x32xf32> to vector<32xf32>
    %98 = vector.shape_cast %97 : vector<32xf32> to vector<32x1xf32>
    %99 = vector.broadcast %98 : vector<32x1xf32> to vector<32x32xf32>
    %100 = arith.subf %96, %99 : vector<32x32xf32>
    %101 = math.exp %100 : vector<32x32xf32>
    %cst_39 = arith.constant dense<0.000000e+00> : vector<32xf32>
    %102 = vector.multi_reduction <add>, %101, %cst_39 [1] : vector<32x32xf32> to vector<32xf32>
    %103 = vector.shape_cast %102 : vector<32xf32> to vector<32x1xf32>
    %104 = tpu.reciprocal %103 {approx = true} : vector<32x1xf32> -> vector<32x1xf32>
    %105 = vector.broadcast %104 : vector<32x1xf32> to vector<32x32xf32>
    %106 = arith.mulf %101, %105 : vector<32x32xf32>
    %107 = arith.truncf %106 : vector<32x32xf32> to vector<32x32xbf16>
    %cst_40 = arith.constant dense<0.000000e+00> : vector<32x8xf32>
    %108 = tpu.matmul %107, %92, %cst_40 {dimension_numbers = #tpu.dot_dimension_numbers<[1], [0], [0], [1], [0, 0, 1, 1], [], []>} : vector<32x32xbf16>, vector<32x8xbf16>, vector<32x8xf32> -> vector<32x8xf32>
    %109 = arith.truncf %108 : vector<32x8xf32> to vector<32x8xbf16>
    %c1_41 = arith.constant 1 : index
    %c0_42 = arith.constant 0 : index
    %c0_43 = arith.constant 0 : index
    %110 = vector.load %arg4[%c1_41, %c0_42, %c0_43] : memref<4x8x32xf32, #tpu.memory_space<vmem>>, vector<1x8x32xf32>
    %111 = vector.shape_cast %110 : vector<1x8x32xf32> to vector<8x32xf32>
    %112 = arith.truncf %111 : vector<8x32xf32> to vector<8x32xbf16>
    %cst_44 = arith.constant dense<0.000000e+00> : vector<32x32xf32>
    %113 = tpu.matmul %109, %112, %cst_44 {dimension_numbers = #tpu.dot_dimension_numbers<[1], [0], [0], [1], [0, 0, 1, 1], [], []>} : vector<32x8xbf16>, vector<8x32xbf16>, vector<32x32xf32> -> vector<32x32xf32>
    %114 = arith.addf %86, %113 : vector<32x32xf32>
    %115 = vector.extract_strided_slice %59 {offsets = [0, 16], sizes = [32, 8], strides = [1, 1]} : vector<32x96xf32> to vector<32x8xf32>
    %116 = arith.truncf %115 : vector<32x8xf32> to vector<32x8xbf16>
    %117 = vector.extract_strided_slice %59 {offsets = [0, 48], sizes = [32, 8], strides = [1, 1]} : vector<32x96xf32> to vector<32x8xf32>
    %118 = arith.truncf %117 : vector<32x8xf32> to vector<32x8xbf16>
    %119 = vector.extract_strided_slice %59 {offsets = [0, 80], sizes = [32, 8], strides = [1, 1]} : vector<32x96xf32> to vector<32x8xf32>
    %120 = arith.truncf %119 : vector<32x8xf32> to vector<32x8xbf16>
    %cst_45 = arith.constant dense<0.000000e+00> : vector<32x32xf32>
    %121 = tpu.matmul %116, %118, %cst_45 {dimension_numbers = #tpu.dot_dimension_numbers<[1], [1], [0], [0], [0, 0, 1, 0], [], []>} : vector<32x8xbf16>, vector<32x8xbf16>, vector<32x32xf32> -> vector<32x32xf32>
    %c2_46 = arith.constant 2 : index
    %c0_47 = arith.constant 0 : index
    %c0_48 = arith.constant 0 : index
    %122 = vector.load %arg7[%c2_46, %c0_47, %c0_48] : memref<4x32x32xf32, #tpu.memory_space<vmem>>, vector<1x32x32xf32>
    %123 = vector.shape_cast %122 : vector<1x32x32xf32> to vector<32x32xf32>
    %124 = arith.addf %121, %123 : vector<32x32xf32>
    %cst_49 = arith.constant dense<0xFF800000> : vector<32xf32>
    %125 = vector.multi_reduction <maximumf>, %124, %cst_49 [1] : vector<32x32xf32> to vector<32xf32>
    %126 = vector.shape_cast %125 : vector<32xf32> to vector<32x1xf32>
    %127 = vector.broadcast %126 : vector<32x1xf32> to vector<32x32xf32>
    %128 = arith.subf %124, %127 : vector<32x32xf32>
    %129 = math.exp %128 : vector<32x32xf32>
    %cst_50 = arith.constant dense<0.000000e+00> : vector<32xf32>
    %130 = vector.multi_reduction <add>, %129, %cst_50 [1] : vector<32x32xf32> to vector<32xf32>
    %131 = vector.shape_cast %130 : vector<32xf32> to vector<32x1xf32>
    %132 = tpu.reciprocal %131 {approx = true} : vector<32x1xf32> -> vector<32x1xf32>
    %133 = vector.broadcast %132 : vector<32x1xf32> to vector<32x32xf32>
    %134 = arith.mulf %129, %133 : vector<32x32xf32>
    %135 = arith.truncf %134 : vector<32x32xf32> to vector<32x32xbf16>
    %cst_51 = arith.constant dense<0.000000e+00> : vector<32x8xf32>
    %136 = tpu.matmul %135, %120, %cst_51 {dimension_numbers = #tpu.dot_dimension_numbers<[1], [0], [0], [1], [0, 0, 1, 1], [], []>} : vector<32x32xbf16>, vector<32x8xbf16>, vector<32x8xf32> -> vector<32x8xf32>
    %137 = arith.truncf %136 : vector<32x8xf32> to vector<32x8xbf16>
    %c2_52 = arith.constant 2 : index
    %c0_53 = arith.constant 0 : index
    %c0_54 = arith.constant 0 : index
    %138 = vector.load %arg4[%c2_52, %c0_53, %c0_54] : memref<4x8x32xf32, #tpu.memory_space<vmem>>, vector<1x8x32xf32>
    %139 = vector.shape_cast %138 : vector<1x8x32xf32> to vector<8x32xf32>
    %140 = arith.truncf %139 : vector<8x32xf32> to vector<8x32xbf16>
    %cst_55 = arith.constant dense<0.000000e+00> : vector<32x32xf32>
    %141 = tpu.matmul %137, %140, %cst_55 {dimension_numbers = #tpu.dot_dimension_numbers<[1], [0], [0], [1], [0, 0, 1, 1], [], []>} : vector<32x8xbf16>, vector<8x32xbf16>, vector<32x32xf32> -> vector<32x32xf32>
    %142 = arith.addf %114, %141 : vector<32x32xf32>
    %143 = vector.extract_strided_slice %59 {offsets = [0, 24], sizes = [32, 8], strides = [1, 1]} : vector<32x96xf32> to vector<32x8xf32>
    %144 = arith.truncf %143 : vector<32x8xf32> to vector<32x8xbf16>
    %145 = vector.extract_strided_slice %59 {offsets = [0, 56], sizes = [32, 8], strides = [1, 1]} : vector<32x96xf32> to vector<32x8xf32>
    %146 = arith.truncf %145 : vector<32x8xf32> to vector<32x8xbf16>
    %147 = vector.extract_strided_slice %59 {offsets = [0, 88], sizes = [32, 8], strides = [1, 1]} : vector<32x96xf32> to vector<32x8xf32>
    %148 = arith.truncf %147 : vector<32x8xf32> to vector<32x8xbf16>
    %cst_56 = arith.constant dense<0.000000e+00> : vector<32x32xf32>
    %149 = tpu.matmul %144, %146, %cst_56 {dimension_numbers = #tpu.dot_dimension_numbers<[1], [1], [0], [0], [0, 0, 1, 0], [], []>} : vector<32x8xbf16>, vector<32x8xbf16>, vector<32x32xf32> -> vector<32x32xf32>
    %c3_57 = arith.constant 3 : index
    %c0_58 = arith.constant 0 : index
    %c0_59 = arith.constant 0 : index
    %150 = vector.load %arg7[%c3_57, %c0_58, %c0_59] : memref<4x32x32xf32, #tpu.memory_space<vmem>>, vector<1x32x32xf32>
    %151 = vector.shape_cast %150 : vector<1x32x32xf32> to vector<32x32xf32>
    %152 = arith.addf %149, %151 : vector<32x32xf32>
    %cst_60 = arith.constant dense<0xFF800000> : vector<32xf32>
    %153 = vector.multi_reduction <maximumf>, %152, %cst_60 [1] : vector<32x32xf32> to vector<32xf32>
    %154 = vector.shape_cast %153 : vector<32xf32> to vector<32x1xf32>
    %155 = vector.broadcast %154 : vector<32x1xf32> to vector<32x32xf32>
    %156 = arith.subf %152, %155 : vector<32x32xf32>
    %157 = math.exp %156 : vector<32x32xf32>
    %cst_61 = arith.constant dense<0.000000e+00> : vector<32xf32>
    %158 = vector.multi_reduction <add>, %157, %cst_61 [1] : vector<32x32xf32> to vector<32xf32>
    %159 = vector.shape_cast %158 : vector<32xf32> to vector<32x1xf32>
    %160 = tpu.reciprocal %159 {approx = true} : vector<32x1xf32> -> vector<32x1xf32>
    %161 = vector.broadcast %160 : vector<32x1xf32> to vector<32x32xf32>
    %162 = arith.mulf %157, %161 : vector<32x32xf32>
    %163 = arith.truncf %162 : vector<32x32xf32> to vector<32x32xbf16>
    %cst_62 = arith.constant dense<0.000000e+00> : vector<32x8xf32>
    %164 = tpu.matmul %163, %148, %cst_62 {dimension_numbers = #tpu.dot_dimension_numbers<[1], [0], [0], [1], [0, 0, 1, 1], [], []>} : vector<32x32xbf16>, vector<32x8xbf16>, vector<32x8xf32> -> vector<32x8xf32>
    %165 = arith.truncf %164 : vector<32x8xf32> to vector<32x8xbf16>
    %c3_63 = arith.constant 3 : index
    %c0_64 = arith.constant 0 : index
    %c0_65 = arith.constant 0 : index
    %166 = vector.load %arg4[%c3_63, %c0_64, %c0_65] : memref<4x8x32xf32, #tpu.memory_space<vmem>>, vector<1x8x32xf32>
    %167 = vector.shape_cast %166 : vector<1x8x32xf32> to vector<8x32xf32>
    %168 = arith.truncf %167 : vector<8x32xf32> to vector<8x32xbf16>
    %cst_66 = arith.constant dense<0.000000e+00> : vector<32x32xf32>
    %169 = tpu.matmul %165, %168, %cst_66 {dimension_numbers = #tpu.dot_dimension_numbers<[1], [0], [0], [1], [0, 0, 1, 1], [], []>} : vector<32x8xbf16>, vector<8x32xbf16>, vector<32x32xf32> -> vector<32x32xf32>
    %170 = arith.addf %142, %169 : vector<32x32xf32>
    %c6 = arith.constant 6 : index
    %c0_67 = arith.constant 0 : index
    %171 = vector.load %arg8[%c6, %c0_67] : memref<16x128xf32, #tpu.memory_space<vmem>>, vector<1x32xf32>
    %172 = vector.broadcast %171 : vector<1x32xf32> to vector<32x32xf32>
    %173 = arith.addf %170, %172 : vector<32x32xf32>
    %174 = arith.addf %29, %173 : vector<32x32xf32>
    %c7 = arith.constant 7 : index
    %c0_68 = arith.constant 0 : index
    %175 = vector.load %arg8[%c7, %c0_68] : memref<16x128xf32, #tpu.memory_space<vmem>>, vector<1x32xf32>
    %c8 = arith.constant 8 : index
    %c0_69 = arith.constant 0 : index
    %176 = vector.load %arg8[%c8, %c0_69] : memref<16x128xf32, #tpu.memory_space<vmem>>, vector<1x32xf32>
    %cst_70 = arith.constant dense<0.000000e+00> : vector<32xf32>
    %177 = vector.multi_reduction <add>, %174, %cst_70 [1] : vector<32x32xf32> to vector<32xf32>
    %178 = vector.shape_cast %177 : vector<32xf32> to vector<32x1xf32>
    %cst_71 = arith.constant 3.200000e+01 : f32
    %179 = vector.broadcast %cst_71 : f32 to vector<32x1xf32>
    %180 = arith.divf %178, %179 : vector<32x1xf32>
    %181 = vector.broadcast %180 : vector<32x1xf32> to vector<32x32xf32>
    %182 = arith.subf %174, %181 : vector<32x32xf32>
    %183 = arith.mulf %182, %182 : vector<32x32xf32>
    %cst_72 = arith.constant dense<0.000000e+00> : vector<32xf32>
    %184 = vector.multi_reduction <add>, %183, %cst_72 [1] : vector<32x32xf32> to vector<32xf32>
    %185 = vector.shape_cast %184 : vector<32xf32> to vector<32x1xf32>
    %cst_73 = arith.constant 3.200000e+01 : f32
    %186 = vector.broadcast %cst_73 : f32 to vector<32x1xf32>
    %187 = arith.divf %185, %186 : vector<32x1xf32>
    %188 = vector.broadcast %180 : vector<32x1xf32> to vector<32x32xf32>
    %189 = arith.subf %174, %188 : vector<32x32xf32>
    %cst_74 = arith.constant 9.99999974E-6 : f32
    %190 = vector.broadcast %cst_74 : f32 to vector<32x1xf32>
    %191 = arith.addf %187, %190 : vector<32x1xf32>
    %192 = math.rsqrt %191 : vector<32x1xf32>
    %193 = vector.broadcast %192 : vector<32x1xf32> to vector<32x32xf32>
    %194 = arith.mulf %189, %193 : vector<32x32xf32>
    %195 = vector.broadcast %175 : vector<1x32xf32> to vector<32x32xf32>
    %196 = arith.mulf %194, %195 : vector<32x32xf32>
    %197 = vector.broadcast %176 : vector<1x32xf32> to vector<32x32xf32>
    %198 = arith.addf %196, %197 : vector<32x32xf32>
    %199 = arith.truncf %198 : vector<32x32xf32> to vector<32x32xbf16>
    %c0_75 = arith.constant 0 : index
    %c0_76 = arith.constant 0 : index
    %200 = vector.load %arg5[%c0_75, %c0_76] : memref<32x128xbf16, #tpu.memory_space<vmem>>, vector<32x128xbf16>
    %cst_77 = arith.constant dense<0.000000e+00> : vector<32x128xf32>
    %201 = tpu.matmul %199, %200, %cst_77 {dimension_numbers = #tpu.dot_dimension_numbers<[1], [0], [0], [1], [0, 0, 1, 1], [], []>} : vector<32x32xbf16>, vector<32x128xbf16>, vector<32x128xf32> -> vector<32x128xf32>
    %c9 = arith.constant 9 : index
    %c0_78 = arith.constant 0 : index
    %202 = vector.load %arg8[%c9, %c0_78] : memref<16x128xf32, #tpu.memory_space<vmem>>, vector<1x128xf32>
    %203 = vector.broadcast %202 : vector<1x128xf32> to vector<32x128xf32>
    %204 = arith.addf %201, %203 : vector<32x128xf32>
    %cst_79 = arith.constant 5.000000e-01 : f32
    %205 = vector.broadcast %cst_79 : f32 to vector<32x128xf32>
    %206 = arith.mulf %205, %204 : vector<32x128xf32>
    %cst_80 = arith.constant 0.707106769 : f32
    %207 = vector.broadcast %cst_80 : f32 to vector<32x128xf32>
    %208 = arith.mulf %204, %207 : vector<32x128xf32>
    %209 = math.erf %208 : vector<32x128xf32>
    %cst_81 = arith.constant 1.000000e+00 : f32
    %210 = vector.broadcast %cst_81 : f32 to vector<32x128xf32>
    %211 = arith.addf %210, %209 : vector<32x128xf32>
    %212 = arith.mulf %206, %211 : vector<32x128xf32>
    %213 = arith.truncf %212 : vector<32x128xf32> to vector<32x128xbf16>
    %c0_82 = arith.constant 0 : index
    %c0_83 = arith.constant 0 : index
    %214 = vector.load %arg6[%c0_82, %c0_83] : memref<128x32xbf16, #tpu.memory_space<vmem>>, vector<128x32xbf16>
    %cst_84 = arith.constant dense<0.000000e+00> : vector<32x32xf32>
    %215 = tpu.matmul %213, %214, %cst_84 {dimension_numbers = #tpu.dot_dimension_numbers<[1], [0], [0], [1], [0, 0, 1, 1], [], []>} : vector<32x128xbf16>, vector<128x32xbf16>, vector<32x32xf32> -> vector<32x32xf32>
    %c10 = arith.constant 10 : index
    %c0_85 = arith.constant 0 : index
    %216 = vector.load %arg8[%c10, %c0_85] : memref<16x128xf32, #tpu.memory_space<vmem>>, vector<1x32xf32>
    %217 = vector.broadcast %216 : vector<1x32xf32> to vector<32x32xf32>
    %218 = arith.addf %215, %217 : vector<32x32xf32>
    %219 = arith.addf %174, %218 : vector<32x32xf32>
    %c11 = arith.constant 11 : index
    %c0_86 = arith.constant 0 : index
    %220 = vector.load %arg8[%c11, %c0_86] : memref<16x128xf32, #tpu.memory_space<vmem>>, vector<1x32xf32>
    %c12 = arith.constant 12 : index
    %c0_87 = arith.constant 0 : index
    %221 = vector.load %arg8[%c12, %c0_87] : memref<16x128xf32, #tpu.memory_space<vmem>>, vector<1x32xf32>
    %cst_88 = arith.constant dense<0.000000e+00> : vector<32xf32>
    %222 = vector.multi_reduction <add>, %219, %cst_88 [1] : vector<32x32xf32> to vector<32xf32>
    %223 = vector.shape_cast %222 : vector<32xf32> to vector<32x1xf32>
    %cst_89 = arith.constant 3.200000e+01 : f32
    %224 = vector.broadcast %cst_89 : f32 to vector<32x1xf32>
    %225 = arith.divf %223, %224 : vector<32x1xf32>
    %226 = vector.broadcast %225 : vector<32x1xf32> to vector<32x32xf32>
    %227 = arith.subf %219, %226 : vector<32x32xf32>
    %228 = arith.mulf %227, %227 : vector<32x32xf32>
    %cst_90 = arith.constant dense<0.000000e+00> : vector<32xf32>
    %229 = vector.multi_reduction <add>, %228, %cst_90 [1] : vector<32x32xf32> to vector<32xf32>
    %230 = vector.shape_cast %229 : vector<32xf32> to vector<32x1xf32>
    %cst_91 = arith.constant 3.200000e+01 : f32
    %231 = vector.broadcast %cst_91 : f32 to vector<32x1xf32>
    %232 = arith.divf %230, %231 : vector<32x1xf32>
    %233 = vector.broadcast %225 : vector<32x1xf32> to vector<32x32xf32>
    %234 = arith.subf %219, %233 : vector<32x32xf32>
    %cst_92 = arith.constant 9.99999974E-6 : f32
    %235 = vector.broadcast %cst_92 : f32 to vector<32x1xf32>
    %236 = arith.addf %232, %235 : vector<32x1xf32>
    %237 = math.rsqrt %236 : vector<32x1xf32>
    %238 = vector.broadcast %237 : vector<32x1xf32> to vector<32x32xf32>
    %239 = arith.mulf %234, %238 : vector<32x32xf32>
    %240 = vector.broadcast %220 : vector<1x32xf32> to vector<32x32xf32>
    %241 = arith.mulf %239, %240 : vector<32x32xf32>
    %242 = vector.broadcast %221 : vector<1x32xf32> to vector<32x32xf32>
    %243 = arith.addf %241, %242 : vector<32x32xf32>
    %c0_93 = arith.constant 0 : index
    %c0_94 = arith.constant 0 : index
    %244 = vector.load %arg9[%c0_93, %c0_94] : memref<32x32xf32, #tpu.memory_space<vmem>>, vector<32x32xf32>
    tpu.vector_store %arg9[%c0_93, %c0_94], %243 {strides = array<i32>} : memref<32x32xf32, #tpu.memory_space<vmem>>, vector<32x32xf32>,
    return
  }
  func.func @transform_0(%arg0: i32) -> (i32, i32) {
    %c0_i32 = arith.constant 0 : i32
    %c0_i32_0 = arith.constant 0 : i32
    return %arg0, %c0_i32 : i32, i32
  }
  func.func @transform_1(%arg0: i32) -> (i32, i32) {
    %c0_i32 = arith.constant 0 : i32
    %c0_i32_0 = arith.constant 0 : i32
    %c0_i32_1 = arith.constant 0 : i32
    return %c0_i32, %c0_i32_0 : i32, i32
  }
  func.func @transform_2(%arg0: i32) -> (i32, i32) {
    %c0_i32 = arith.constant 0 : i32
    %c0_i32_0 = arith.constant 0 : i32
    %c0_i32_1 = arith.constant 0 : i32
    return %c0_i32, %c0_i32_0 : i32, i32
  }
  func.func @transform_3(%arg0: i32) -> (i32, i32, i32) {
    %c0_i32 = arith.constant 0 : i32
    %c0_i32_0 = arith.constant 0 : i32
    %c0_i32_1 = arith.constant 0 : i32
    %c0_i32_2 = arith.constant 0 : i32
    return %c0_i32, %c0_i32_0, %c0_i32_1 : i32, i32, i32
  }
  func.func @transform_4(%arg0: i32) -> (i32, i32) {
    %c0_i32 = arith.constant 0 : i32
    %c0_i32_0 = arith.constant 0 : i32
    %c0_i32_1 = arith.constant 0 : i32
    return %c0_i32, %c0_i32_0 : i32, i32
  }
  func.func @transform_5(%arg0: i32) -> (i32, i32) {
    %c0_i32 = arith.constant 0 : i32
    %c0_i32_0 = arith.constant 0 : i32
    %c0_i32_1 = arith.constant 0 : i32
    return %c0_i32, %c0_i32_0 : i32, i32
  }
  func.func @transform_6(%arg0: i32) -> (i32, i32, i32) {
    %c0_i32 = arith.constant 0 : i32
    %c0_i32_0 = arith.constant 0 : i32
    %c0_i32_1 = arith.constant 0 : i32
    %c0_i32_2 = arith.constant 0 : i32
    return %c0_i32, %c0_i32_0, %c0_i32_1 : i32, i32, i32
  }
  func.func @transform_7(%arg0: i32) -> (i32, i32) {
    %c0_i32 = arith.constant 0 : i32
    %c0_i32_0 = arith.constant 0 : i32
    %c0_i32_1 = arith.constant 0 : i32
    return %c0_i32, %c0_i32_0 : i32, i32
  }
  func.func @transform_8(%arg0: i32) -> (i32, i32) {
    %c0_i32 = arith.constant 0 : i32
    %c0_i32_0 = arith.constant 0 : i32
    return %arg0, %c0_i32 : i32, i32
  }
}

</mosaic_0001>

<llo_original>
// kernel: video_swin_forward.1
$region0: #{video_swin_forward.1}
  #allocation0 [shape = 'u32[]', space=smem, size = 0x4, offset = 0x4, fixed_abs, tag = 'smem constant byte address 0x4 - core index']
  #allocation1 [shape = 'u32[72,128]{1,0:T(1,128)}', space=vmem, size = 0x9000, scoped, tag = 'internal scratch']
  %s0 = inlined_call_operand.vmem [shape: bf16[64,128], index: 0, kind: input, shape index: {}]
  %s1 = inlined_call_operand.vmem [shape: bf16[128,32], index: 1, kind: input, shape index: {}]
  %s2 = inlined_call_operand.vmem [shape: bf16[32,96], index: 2, kind: input, shape index: {}]
  %s3 = inlined_call_operand.vmem [shape: f32[4,8,32], index: 3, kind: input, shape index: {}]
  %s4 = inlined_call_operand.vmem [shape: bf16[32,128], index: 4, kind: input, shape index: {}]
  %s5 = inlined_call_operand.vmem [shape: bf16[128,32], index: 5, kind: input, shape index: {}]
  %s6 = inlined_call_operand.vmem [shape: f32[4,32,32], index: 6, kind: input, shape index: {}]
  %s7 = inlined_call_operand.vmem [shape: f32[16,128], index: 7, kind: input, shape index: {}]
  %s8 = inlined_call_operand.hbm [shape: f32[64,32], index: 8, kind: output, shape index: {}]
  %s9 = sld [smem:[#allocation0]]
  $region65: #{video_swin_forward.1} parent=0
    _
  %s11 = ssub.s32 1, %s9
  %s12 = scalar_select 0, %s11, %s9
  $region1: #{video_swin_forward.1} parent=0
    #allocation2 [shape = 'u8[32768]{0}', space=vmem, size = 0x8000, scoped, tag = 'output window, operand 0']
    #allocation3 [shape = 's32[2]{0}', space=sflag, size = 0x8, scoped, tag = 'scoped memory for video_swin_forward.1']
    %13 = vsyncpa [#allocation3], 0
    %s14 = scalar_lea.sflag [#allocation3], 1
    %15 = vsyncpa %s14, 0
    loop: start=0, step=1, limit=4
    $region2: #{video_swin_forward.1} parent=1 // loop_pre_header
      _
    $region3: #{video_swin_forward.1} parent=1 // loop_header
      %s17 = sphi 0, %s21
      %p18 = scmp.ge.s32.totalorder %s17, 4
      %s27 = sphi 0, %s29
      %s30 = sphi 0, %s27
      %s31 = sphi 0, %s30
      %s47 = sphi 0, %s31
      %s51 = sphi 0, %s51
      %s53 = sphi 0, %s51
      %s54 = sphi 0, %s53
      %s68 = sphi 0, %s54
      %s72 = sphi 0, %s72
      %s74 = sphi 0, %s72
      %s75 = sphi 0, %s74
      %s89 = sphi 0, %s75
      %s93 = sphi 0, %s93
      %s95 = sphi 0, %s93
      %s96 = sphi 0, %s95
      %s110 = sphi 0, %s96
      %s114 = sphi 0, %s114
      %s116 = sphi 0, %s114
      %s117 = sphi 0, %s116
      %s131 = sphi 0, %s117
      %s135 = sphi 0, %s135
      %s137 = sphi 0, %s135
      %s138 = sphi 0, %s137
      %s152 = sphi 0, %s138
      %s156 = sphi 0, %s156
      %s158 = sphi 0, %s156
      %s159 = sphi 0, %s158
      %s173 = sphi 0, %s159
      %s177 = sphi 0, %s177
      %s179 = sphi 0, %s177
      %s180 = sphi 0, %s179
      %s194 = sphi 0, %s180
      %s200 = sphi 0, %s202
      %s203 = sphi 0, %s200
      %s204 = sphi 0, %s203
      %s220 = sphi 0, %s204
    $region4: #{video_swin_forward.1} parent=1 // loop_header_branch
      %20 = sbr.rel (%p18) target = $region8
    $region5: #{video_swin_forward.1} parent=1 // loop_body
      %s22 = ssub.s32 %s17, 1
      %s23 = ssub.s32 %s17, 2
      %s24 = sadd.s32 %s17, 1
      %s25 = ssub.s32 %s17, %s24
      %p26 = scmp.eq.s32.totalorder %s25, 0
      %s28 = sadd.s32 %s27, 1
      %s29 = scalar_select %p26, %s27, %s28
      %p32 = pneg %p26
      %p33 = scmp.eq.s32.totalorder %s17, 1
      %p34 = por %p32, %p33
      %p35 = scmp.ne.s32.totalorder %s27, %s30
      %p36 = scmp.eq.s32.totalorder %s17, 0
      %p37 = por %p35, %p36
      %p38 = scmp.ne.s32.totalorder %s27, %s30
      %p39 = scmp.eq.s32.totalorder %s22, 1
      %p40 = por %p38, %p39
      %p41 = scmp.ne.s32.totalorder %s30, %s31
      %p42 = scmp.eq.s32.totalorder %s22, 0
      %p43 = por %p41, %p42
      %p44 = scmp.ne.s32.totalorder %s30, %s31
      %p45 = scmp.eq.s32.totalorder %s23, 1
      %p46 = por %p44, %p45
      %p48 = scmp.ne.s32.totalorder %s31, %s47
      %p49 = scmp.eq.s32.totalorder %s23, 0
      %p50 = por %p48, %p49
      %s52 = sadd.s32 %s51, 1
      %p55 = scmp.eq.s32.totalorder %s17, 1
      %p56 = scmp.ne.s32.totalorder %s51, %s53
      %p57 = scmp.eq.s32.totalorder %s17, 0
      %p58 = por %p56, %p57
      %p59 = scmp.ne.s32.totalorder %s51, %s53
      %p60 = scmp.eq.s32.totalorder %s22, 1
      %p61 = por %p59, %p60
      %p62 = scmp.ne.s32.totalorder %s53, %s54
      %p63 = scmp.eq.s32.totalorder %s22, 0
      %p64 = por %p62, %p63
      %p65 = scmp.ne.s32.totalorder %s53, %s54
      %p66 = scmp.eq.s32.totalorder %s23, 1
      %p67 = por %p65, %p66
      %p69 = scmp.ne.s32.totalorder %s54, %s68
      %p70 = scmp.eq.s32.totalorder %s23, 0
      %p71 = por %p69, %p70
      %s73 = sadd.s32 %s72, 1
      %p76 = scmp.eq.s32.totalorder %s17, 1
      %p77 = scmp.ne.s32.totalorder %s72, %s74
      %p78 = scmp.eq.s32.totalorder %s17, 0
      %p79 = por %p77, %p78
      %p80 = scmp.ne.s32.totalorder %s72, %s74
      %p81 = scmp.eq.s32.totalorder %s22, 1
      %p82 = por %p80, %p81
      %p83 = scmp.ne.s32.totalorder %s74, %s75
      %p84 = scmp.eq.s32.totalorder %s22, 0
      %p85 = por %p83, %p84
      %p86 = scmp.ne.s32.totalorder %s74, %s75
      %p87 = scmp.eq.s32.totalorder %s23, 1
      %p88 = por %p86, %p87
      %p90 = scmp.ne.s32.totalorder %s75, %s89
      %p91 = scmp.eq.s32.totalorder %s23, 0
      %p92 = por %p90, %p91
      %s94 = sadd.s32 %s93, 1
      %p97 = scmp.eq.s32.totalorder %s17, 1
      %p98 = scmp.ne.s32.totalorder %s93, %s95
      %p99 = scmp.eq.s32.totalorder %s17, 0
      %p100 = por %p98, %p99
      %p101 = scmp.ne.s32.totalorder %s93, %s95
      %p102 = scmp.eq.s32.totalorder %s22, 1
      %p103 = por %p101, %p102
      %p104 = scmp.ne.s32.totalorder %s95, %s96
      %p105 = scmp.eq.s32.totalorder %s22, 0
      %p106 = por %p104, %p105
      %p107 = scmp.ne.s32.totalorder %s95, %s96
      %p108 = scmp.eq.s32.totalorder %s23, 1
      %p109 = por %p107, %p108
      %p111 = scmp.ne.s32.totalorder %s96, %s110
      %p112 = scmp.eq.s32.totalorder %s23, 0
      %p113 = por %p111, %p112
      %s115 = sadd.s32 %s114, 1
      %p118 = scmp.eq.s32.totalorder %s17, 1
      %p119 = scmp.ne.s32.totalorder %s114, %s116
      %p120 = scmp.eq.s32.totalorder %s17, 0
      %p121 = por %p119, %p120
      %p122 = scmp.ne.s32.totalorder %s114, %s116
      %p123 = scmp.eq.s32.totalorder %s22, 1
      %p124 = por %p122, %p123
      %p125 = scmp.ne.s32.totalorder %s116, %s117
      %p126 = scmp.eq.s32.totalorder %s22, 0
      %p127 = por %p125, %p126
      %p128 = scmp.ne.s32.totalorder %s116, %s117
      %p129 = scmp.eq.s32.totalorder %s23, 1
      %p130 = por %p128, %p129
      %p132 = scmp.ne.s32.totalorder %s117, %s131
      %p133 = scmp.eq.s32.totalorder %s23, 0
      %p134 = por %p132, %p133
      %s136 = sadd.s32 %s135, 1
      %p139 = scmp.eq.s32.totalorder %s17, 1
      %p140 = scmp.ne.s32.totalorder %s135, %s137
      %p141 = scmp.eq.s32.totalorder %s17, 0
      %p142 = por %p140, %p141
      %p143 = scmp.ne.s32.totalorder %s135, %s137
      %p144 = scmp.eq.s32.totalorder %s22, 1
      %p145 = por %p143, %p144
      %p146 = scmp.ne.s32.totalorder %s137, %s138
      %p147 = scmp.eq.s32.totalorder %s22, 0
      %p148 = por %p146, %p147
      %p149 = scmp.ne.s32.totalorder %s137, %s138
      %p150 = scmp.eq.s32.totalorder %s23, 1
      %p151 = por %p149, %p150
      %p153 = scmp.ne.s32.totalorder %s138, %s152
      %p154 = scmp.eq.s32.totalorder %s23, 0
      %p155 = por %p153, %p154
      %s157 = sadd.s32 %s156, 1
      %p160 = scmp.eq.s32.totalorder %s17, 1
      %p161 = scmp.ne.s32.totalorder %s156, %s158
      %p162 = scmp.eq.s32.totalorder %s17, 0
      %p163 = por %p161, %p162
      %p164 = scmp.ne.s32.totalorder %s156, %s158
      %p165 = scmp.eq.s32.totalorder %s22, 1
      %p166 = por %p164, %p165
      %p167 = scmp.ne.s32.totalorder %s158, %s159
      %p168 = scmp.eq.s32.totalorder %s22, 0
      %p169 = por %p167, %p168
      %p170 = scmp.ne.s32.totalorder %s158, %s159
      %p171 = scmp.eq.s32.totalorder %s23, 1
      %p172 = por %p170, %p171
      %p174 = scmp.ne.s32.totalorder %s159, %s173
      %p175 = scmp.eq.s32.totalorder %s23, 0
      %p176 = por %p174, %p175
      %s178 = sadd.s32 %s177, 1
      %p181 = scmp.eq.s32.totalorder %s17, 1
      %p182 = scmp.ne.s32.totalorder %s177, %s179
      %p183 = scmp.eq.s32.totalorder %s17, 0
      %p184 = por %p182, %p183
      %p185 = scmp.ne.s32.totalorder %s177, %s179
      %p186 = scmp.eq.s32.totalorder %s22, 1
      %p187 = por %p185, %p186
      %p188 = scmp.ne.s32.totalorder %s179, %s180
      %p189 = scmp.eq.s32.totalorder %s22, 0
      %p190 = por %p188, %p189
      %p191 = scmp.ne.s32.totalorder %s179, %s180
      %p192 = scmp.eq.s32.totalorder %s23, 1
      %p193 = por %p191, %p192
      %p195 = scmp.ne.s32.totalorder %s180, %s194
      %p196 = scmp.eq.s32.totalorder %s23, 0
      %p197 = por %p195, %p196
      %s198 = ssub.s32 %s17, %s24
      %p199 = scmp.eq.s32.totalorder %s198, 0
      %s201 = sadd.s32 %s200, 1
      %s202 = scalar_select %p199, %s200, %s201
      %p205 = pneg %p199
      %p206 = scmp.eq.s32.totalorder %s17, 1
      %p207 = por %p205, %p206
      %p208 = scmp.ne.s32.totalorder %s200, %s203
      %p209 = scmp.eq.s32.totalorder %s17, 0
      %p210 = por %p208, %p209
      %p211 = scmp.ne.s32.totalorder %s200, %s203
      %p212 = scmp.eq.s32.totalorder %s22, 1
      %p213 = por %p211, %p212
      %p214 = scmp.ne.s32.totalorder %s203, %s204
      %p215 = scmp.eq.s32.totalorder %s22, 0
      %p216 = por %p214, %p215
      %p217 = scmp.ne.s32.totalorder %s203, %s204
      %p218 = scmp.eq.s32.totalorder %s23, 1
      %p219 = por %p217, %p218
      %p221 = scmp.ne.s32.totalorder %s204, %s220
      %p222 = scmp.eq.s32.totalorder %s23, 0
      %p223 = por %p221, %p222
      %p224 = scmp.le.s32.totalorder 1, %s17
      %p225 = scmp.lt.s32.totalorder %s17, 3
      %p226 = pnand %p224, %p225
      %p227 = pneg %p226
      // Predicated region
      $region9: #{video_swin_forward.1} parent=5 // pred_check
        _
      $region10: #{video_swin_forward.1} parent=5 // pred_check_branch
        %229 = sbr.rel (%p226) target = $region12
      $region11: #{video_swin_forward.1} parent=5 // pred_region
        %s230 = ssub.s32 %s17, 1
        // Predicated region
        $region13: #{video_swin_forward.1} parent=11 // pred_check
          %p231 = pneg %p64
        $region14: #{video_swin_forward.1} parent=11 // pred_check_branch
          %233 = sbr.rel (%p231) target = $region16
        $region15: #{video_swin_forward.1} parent=11 // pred_region
          _
        $region16: #{video_swin_forward.1} parent=11 // pred_fallthru
          _
        // Predicated region
        $region17: #{video_swin_forward.1} parent=11 // pred_check
          %p234 = pneg %p85
        $region18: #{video_swin_forward.1} parent=11 // pred_check_branch
          %236 = sbr.rel (%p234) target = $region20
        $region19: #{video_swin_forward.1} parent=11 // pred_region
          _
        $region20: #{video_swin_forward.1} parent=11 // pred_fallthru
          _
        // Predicated region
        $region21: #{video_swin_forward.1} parent=11 // pred_check
          %p237 = pneg %p106
        $region22: #{video_swin_forward.1} parent=11 // pred_check_branch
          %239 = sbr.rel (%p237) target = $region24
        $region23: #{video_swin_forward.1} parent=11 // pred_region
          _
        $region24: #{video_swin_forward.1} parent=11 // pred_fallthru
          _
        // Predicated region
        $region25: #{video_swin_forward.1} parent=11 // pred_check
          %p240 = pneg %p127
        $region26: #{video_swin_forward.1} parent=11 // pred_check_branch
          %242 = sbr.rel (%p240) target = $region28
        $region27: #{video_swin_forward.1} parent=11 // pred_region
          _
        $region28: #{video_swin_forward.1} parent=11 // pred_fallthru
          _
        // Predicated region
        $region29: #{video_swin_forward.1} parent=11 // pred_check
          %p243 = pneg %p148
        $region30: #{video_swin_forward.1} parent=11 // pred_check_branch
          %245 = sbr.rel (%p243) target = $region32
        $region31: #{video_swin_forward.1} parent=11 // pred_region
          _
        $region32: #{video_swin_forward.1} parent=11 // pred_fallthru
          _
        // Predicated region
        $region33: #{video_swin_forward.1} parent=11 // pred_check
          %p246 = pneg %p169
        $region34: #{video_swin_forward.1} parent=11 // pred_check_branch
          %248 = sbr.rel (%p246) target = $region36
        $region35: #{video_swin_forward.1} parent=11 // pred_region
          _
        $region36: #{video_swin_forward.1} parent=11 // pred_fallthru
          _
        // Predicated region
        $region37: #{video_swin_forward.1} parent=11 // pred_check
          %p249 = pneg %p190
        $region38: #{video_swin_forward.1} parent=11 // pred_check_branch
          %251 = sbr.rel (%p249) target = $region40
        $region39: #{video_swin_forward.1} parent=11 // pred_region
          _
        $region40: #{video_swin_forward.1} parent=11 // pred_fallthru
          _
      $region12: #{video_swin_forward.1} parent=5 // pred_fallthru
        _
      %p252 = scmp.lt.s32.totalorder %s17, 2
      // Predicated region
      $region41: #{video_swin_forward.1} parent=5 // pred_check
        %p253 = pneg %p252
      $region42: #{video_swin_forward.1} parent=5 // pred_check_branch
        %255 = sbr.rel (%p253) target = $region44
      $region43: #{video_swin_forward.1} parent=5 // pred_region
        // Predicated region
        $region45: #{video_swin_forward.1} parent=43 // pred_check
          %p256 = pneg %p37
        $region46: #{video_swin_forward.1} parent=43 // pred_check_branch
          %258 = sbr.rel (%p256) target = $region48
        $region47: #{video_swin_forward.1} parent=43 // pred_region
          %s259 = smul.u32 4, %s17
          %p260 = scmp.lt.s32.totalorder %s259, 7
          %s261 = scalar_select %p260, %s259, 7
          %s262 = smul.addr %s261, 4
          %s263 = scalar_lea.vmem %s0, %s262
          %s264 = smul.u32 4, %s17
        $region48: #{video_swin_forward.1} parent=43 // pred_fallthru
          _
      $region44: #{video_swin_forward.1} parent=5 // pred_fallthru
        _
      %p265 = scmp.le.s32.totalorder 1, %s17
      %p266 = scmp.lt.s32.totalorder %s17, 3
      %p267 = pnand %p265, %p266
      %p268 = pneg %p267
      // Predicated region
      $region49: #{video_swin_forward.1} parent=5 // pred_check
        _
      $region50: #{video_swin_forward.1} parent=5 // pred_check_branch
        %270 = sbr.rel (%p267) target = $region52
      $region51: #{video_swin_forward.1} parent=5 // pred_region
        %s271 = ssub.s32 %s17, 1
        %s272 = smul.u32 4, %s22
        %p273 = scmp.lt.s32.totalorder %s272, 7
        %s274 = scalar_select %p273, %s272, 7
        %s275 = smul.addr %s274, 4
        %s276 = scalar_lea.vmem %s0, %s275
        %p277 = pneg %p43
        %p278 = pneg %p40
        %p279 = pneg %p64
        %p280 = pneg %p61
        %p281 = pneg %p85
        %p282 = pneg %p82
        %p283 = pneg %p106
        %p284 = pneg %p103
        %p285 = pneg %p127
        %p286 = pneg %p124
        %p287 = pneg %p148
        %p288 = pneg %p145
        %p289 = pneg %p169
        %p290 = pneg %p166
        %p291 = pneg %p190
        %p292 = pneg %p187
        %p293 = pneg %p216
        %p294 = pneg %p213
        %s295 = sand.u32 %s203, 1
        %s296 = scalar_lea.sflag [#allocation3], %s295
        %s297 = sand.u32 %s203, 1
        %s298 = smul.addr %s297, 32
        %s299 = scalar_lea.vmem [#allocation2], %s298
        %s300 = smul.u32 4, %s22
        %p301 = scmp.lt.s32.totalorder %s300, 7
        %s302 = scalar_select %p301, %s300, 7
        %s303 = smul.addr %s302, 4
        %s304 = scalar_lea.vmem %s0, %s303
        %s305 = smul.u32 4, %s22
        %s306 = smul.u32 4, %s22
        %v308 = vld [vmem:[%s304] sm:$0xf]
        %v309 = vld [vmem:[%s304 + $0x4] sm:$0xf]
        %v310 = vld [vmem:[%s304 + $0x8] sm:$0xf]
        %v311 = vld [vmem:[%s304 + $0xc] sm:$0xf]
        %v312 = vld [vmem:[%s1] sm:$0xf]
        %v313 = vld [vmem:[%s1 + $0x4] sm:$0xf]
        %v314 = vld [vmem:[%s1 + $0x8] sm:$0xf]
        %v315 = vld [vmem:[%s1 + $0xc] sm:$0xf]
        %v316 = vld [vmem:[%s1 + $0x10] sm:$0xf]
        %v317 = vld [vmem:[%s1 + $0x14] sm:$0xf]
        %v318 = vld [vmem:[%s1 + $0x18] sm:$0xf]
        %v319 = vld [vmem:[%s1 + $0x1c] sm:$0xf]
        %v320 = vld [vmem:[%s1 + $0x20] sm:$0xf]
        %v321 = vld [vmem:[%s1 + $0x24] sm:$0xf]
        %v322 = vld [vmem:[%s1 + $0x28] sm:$0xf]
        %v323 = vld [vmem:[%s1 + $0x2c] sm:$0xf]
        %v324 = vld [vmem:[%s1 + $0x30] sm:$0xf]
        %v325 = vld [vmem:[%s1 + $0x34] sm:$0xf]
        %v326 = vld [vmem:[%s1 + $0x38] sm:$0xf]
        %v327 = vld [vmem:[%s1 + $0x3c] sm:$0xf]
        %v328 = vld [vmem:[%s7] sm:$0x1]
        %v329 = vperm.slane %v328, 0
        %v334 = vunpack.c.l.b16 %v308
        %v335 = vunpack.c.l.b16 %v309
        %v336 = vunpack.c.l.b16 %v310
        %v337 = vunpack.c.l.b16 %v311
        %v338 = vpack.c.b16 %v335, %v334
        %v339 = vpack.c.b16 %v337, %v336
        %v358 = vunpack.c.l.b16 %v312
        %v359 = vunpack.c.l.b16 %v313
        %v360 = vunpack.c.l.b16 %v314
        %v361 = vunpack.c.l.b16 %v315
        %v362 = vunpack.c.l.b16 %v316
        %v363 = vunpack.c.l.b16 %v317
        %v364 = vunpack.c.l.b16 %v318
        %v365 = vunpack.c.l.b16 %v319
        %v366 = vunpack.c.l.b16 %v320
        %v367 = vunpack.c.l.b16 %v321
        %v368 = vunpack.c.l.b16 %v322
        %v369 = vunpack.c.l.b16 %v323
        %v370 = vunpack.c.l.b16 %v324
        %v371 = vunpack.c.l.b16 %v325
        %v372 = vunpack.c.l.b16 %v326
        %v373 = vunpack.c.l.b16 %v327
        %v374 = vpack.c.b16 %v359, %v358
        %v375 = vpack.c.b16 %v361, %v360
        %v376 = vpack.c.b16 %v363, %v362
        %v377 = vpack.c.b16 %v365, %v364
        %v378 = vpack.c.b16 %v367, %v366
        %v379 = vpack.c.b16 %v369, %v368
        %v380 = vpack.c.b16 %v371, %v370
        %v381 = vpack.c.b16 %v373, %v372
        %390 = vmatpush.bf16.msra.mxu0 %v381
        %391 = vmatpush.bf16.msra.mxu0 %v380
        %392 = vmatpush.bf16.msra.mxu0 %v379
        %393 = vmatpush.bf16.msra.mxu0 %v378
        %394 = vmatpush.bf16.msra.mxu0 %v377
        %395 = vmatpush.bf16.msra.mxu0 %v376
        %396 = vmatpush.bf16.msra.mxu0 %v375
        %397 = vmatpush.bf16.msra.mxu0 %v374
        %398 = vmatmul.bf16.gmra.mxu0 %v338
        %v399 = vpop.f32.mrf.mxu0
        %v400 = vadd.f32 %v329, %v399
        %v401 = vpop.f32.mrf.mxu0
        %v402 = vadd.f32 %v329, %v401
        %403 = vmatmul.bf16.gmra.mxu0 %v339
        %v404 = vpop.f32.mrf.mxu0
        %v405 = vadd.f32 %v329, %v404
        %v406 = vpop.f32.mrf.mxu0
        %v407 = vadd.f32 %v329, %v406
        %408 = vdwg.mxu0
        %v409 = vld [vmem:[%s7 + $0x1] sm:$0x1]
        %v410 = vld [vmem:[%s7 + $0x2] sm:$0x1]
        %vm411 = vcmask 261120
        %v412 = vsel %vm411, %v400, 0.0
        %413 = vadd.xlane.f32.xlu0 %v412
        %v414 = vpop.xlane.xlu0 %413
        %v415 = vsel %vm411, %v402, 0.0
        %416 = vadd.xlane.f32.xlu0 %v415
        %v417 = vpop.xlane.xlu0 %416
        %v418 = vsel %vm411, %v405, 0.0
        %419 = vadd.xlane.f32.xlu0 %v418
        %v420 = vpop.xlane.xlu0 %419
        %v421 = vsel %vm411, %v407, 0.0
        %422 = vadd.xlane.f32.xlu0 %v421
        %v423 = vpop.xlane.xlu0 %422
        %v424 = vrcp.pop 32.0
        %v425 = vmul.f32 32.0, %v424
        %v426 = vsub.f32 1.0, %v425
        %v427 = vmul.f32 %v424, %v426
        %v428 = vadd.f32 %v424, %v427
        %vm429 = vweird.f32 %v424
        %v430 = vsel %vm429, %v424, %v428
        %v431 = vmul.f32 %v414, %v430
        %v432 = vmul.f32 %v417, %v430
        %v433 = vmul.f32 %v420, %v430
        %v434 = vmul.f32 %v423, %v430
        %v435 = vsub.f32 %v400, %v431
        %v436 = vsub.f32 %v402, %v432
        %v437 = vsub.f32 %v405, %v433
        %v438 = vsub.f32 %v407, %v434
        %v439 = vmul.f32 %v435, %v435
        %v440 = vmul.f32 %v436, %v436
        %v441 = vmul.f32 %v437, %v437
        %v442 = vmul.f32 %v438, %v438
        %v443 = vsel %vm411, %v439, 0.0
        %444 = vadd.xlane.f32.xlu0 %v443
        %v445 = vpop.xlane.xlu0 %444
        %v446 = vsel %vm411, %v440, 0.0
        %447 = vadd.xlane.f32.xlu0 %v446
        %v448 = vpop.xlane.xlu0 %447
        %v449 = vsel %vm411, %v441, 0.0
        %450 = vadd.xlane.f32.xlu0 %v449
        %v451 = vpop.xlane.xlu0 %450
        %v452 = vsel %vm411, %v442, 0.0
        %453 = vadd.xlane.f32.xlu0 %v452
        %v454 = vpop.xlane.xlu0 %453
        %v455 = vmul.f32 %v445, %v430
        %v456 = vmul.f32 %v448, %v430
        %v457 = vmul.f32 %v451, %v430
        %v458 = vmul.f32 %v454, %v430
        %v459 = vadd.f32 %v455, 1e-05
        %v460 = vadd.f32 %v456, 1e-05
        %v461 = vadd.f32 %v457, 1e-05
        %v462 = vadd.f32 %v458, 1e-05
        %v463 = vrsqrt.pop %v459
        %v464 = vmul.f32 %v463, %v459
        %v465 = vmul.f32 %v464, %v463
        %v466 = vmul.f32 0.5, %v465
        %v467 = vsub.f32 1.5, %v466
        %v468 = vmul.f32 %v463, %v467
        %vm469 = vweird.f32 %v459
        %vm470 = vweird.f32 %v463
        %vm471 = vmor %vm469, %vm470
        %v472 = vsel %vm471, %v463, %v468
        %v473 = vrsqrt.pop %v460
        %v474 = vmul.f32 %v473, %v460
        %v475 = vmul.f32 %v474, %v473
        %v476 = vmul.f32 0.5, %v475
        %v477 = vsub.f32 1.5, %v476
        %v478 = vmul.f32 %v473, %v477
        %vm479 = vweird.f32 %v460
        %vm480 = vweird.f32 %v473
        %vm481 = vmor %vm479, %vm480
        %v482 = vsel %vm481, %v473, %v478
        %v483 = vrsqrt.pop %v461
        %v484 = vmul.f32 %v483, %v461
        %v485 = vmul.f32 %v484, %v483
        %v486 = vmul.f32 0.5, %v485
        %v487 = vsub.f32 1.5, %v486
        %v488 = vmul.f32 %v483, %v487
        %vm489 = vweird.f32 %v461
        %vm490 = vweird.f32 %v483
        %vm491 = vmor %vm489, %vm490
        %v492 = vsel %vm491, %v483, %v488
        %v493 = vrsqrt.pop %v462
        %v494 = vmul.f32 %v493, %v462
        %v495 = vmul.f32 %v494, %v493
        %v496 = vmul.f32 0.5, %v495
        %v497 = vsub.f32 1.5, %v496
        %v498 = vmul.f32 %v493, %v497
        %vm499 = vweird.f32 %v462
        %vm500 = vweird.f32 %v493
        %vm501 = vmor %vm499, %vm500
        %v502 = vsel %vm501, %v493, %v498
        %v503 = vmul.f32 %v435, %v472
        %v504 = vmul.f32 %v436, %v482
        %v505 = vmul.f32 %v437, %v492
        %v506 = vmul.f32 %v438, %v502
        %v507 = vperm.slane %v409, 0
        %v508 = vmul.f32 %v503, %v507
        %v509 = vmul.f32 %v504, %v507
        %v510 = vmul.f32 %v505, %v507
        %v511 = vmul.f32 %v506, %v507
        %v512 = vperm.slane %v410, 0
        %v513 = vadd.f32 %v508, %v512
        %v514 = vadd.f32 %v509, %v512
        %v515 = vadd.f32 %v510, %v512
        %v516 = vadd.f32 %v511, %v512
        %v517 = vld [vmem:[%s7 + $0x3] sm:$0x1]
        %v518 = vld [vmem:[%s7 + $0x4] sm:$0x1]
        %v519 = vsel %vm411, %v513, 0.0
        %520 = vadd.xlane.f32.xlu0 %v519
        %v521 = vpop.xlane.xlu0 %520
        %v522 = vsel %vm411, %v514, 0.0
        %523 = vadd.xlane.f32.xlu0 %v522
        %v524 = vpop.xlane.xlu0 %523
        %v525 = vsel %vm411, %v515, 0.0
        %526 = vadd.xlane.f32.xlu0 %v525
        %v527 = vpop.xlane.xlu0 %526
        %v528 = vsel %vm411, %v516, 0.0
        %529 = vadd.xlane.f32.xlu0 %v528
        %v530 = vpop.xlane.xlu0 %529
        %v531 = vmul.f32 %v521, %v430
        %v532 = vmul.f32 %v524, %v430
        %v533 = vmul.f32 %v527, %v430
        %v534 = vmul.f32 %v530, %v430
        %v535 = vsub.f32 %v513, %v531
        %v536 = vsub.f32 %v514, %v532
        %v537 = vsub.f32 %v515, %v533
        %v538 = vsub.f32 %v516, %v534
        %v539 = vmul.f32 %v535, %v535
        %v540 = vmul.f32 %v536, %v536
        %v541 = vmul.f32 %v537, %v537
        %v542 = vmul.f32 %v538, %v538
        %v543 = vsel %vm411, %v539, 0.0
        %544 = vadd.xlane.f32.xlu0 %v543
        %v545 = vpop.xlane.xlu0 %544
        %v546 = vsel %vm411, %v540, 0.0
        %547 = vadd.xlane.f32.xlu0 %v546
        %v548 = vpop.xlane.xlu0 %547
        %v549 = vsel %vm411, %v541, 0.0
        %550 = vadd.xlane.f32.xlu0 %v549
        %v551 = vpop.xlane.xlu0 %550
        %v552 = vsel %vm411, %v542, 0.0
        %553 = vadd.xlane.f32.xlu0 %v552
        %v554 = vpop.xlane.xlu0 %553
        %v555 = vmul.f32 %v545, %v430
        %v556 = vmul.f32 %v548, %v430
        %v557 = vmul.f32 %v551, %v430
        %v558 = vmul.f32 %v554, %v430
        %v559 = vadd.f32 %v555, 1e-05
        %v560 = vadd.f32 %v556, 1e-05
        %v561 = vadd.f32 %v557, 1e-05
        %v562 = vadd.f32 %v558, 1e-05
        %v563 = vrsqrt.pop %v559
        %v564 = vmul.f32 %v563, %v559
        %v565 = vmul.f32 %v564, %v563
        %v566 = vmul.f32 0.5, %v565
        %v567 = vsub.f32 1.5, %v566
        %v568 = vmul.f32 %v563, %v567
        %vm569 = vweird.f32 %v559
        %vm570 = vweird.f32 %v563
        %vm571 = vmor %vm569, %vm570
        %v572 = vsel %vm571, %v563, %v568
        %v573 = vrsqrt.pop %v560
        %v574 = vmul.f32 %v573, %v560
        %v575 = vmul.f32 %v574, %v573
        %v576 = vmul.f32 0.5, %v575
        %v577 = vsub.f32 1.5, %v576
        %v578 = vmul.f32 %v573, %v577
        %vm579 = vweird.f32 %v560
        %vm580 = vweird.f32 %v573
        %vm581 = vmor %vm579, %vm580
        %v582 = vsel %vm581, %v573, %v578
        %v583 = vrsqrt.pop %v561
        %v584 = vmul.f32 %v583, %v561
        %v585 = vmul.f32 %v584, %v583
        %v586 = vmul.f32 0.5, %v585
        %v587 = vsub.f32 1.5, %v586
        %v588 = vmul.f32 %v583, %v587
        %vm589 = vweird.f32 %v561
        %vm590 = vweird.f32 %v583
        %vm591 = vmor %vm589, %vm590
        %v592 = vsel %vm591, %v583, %v588
        %v593 = vrsqrt.pop %v562
        %v594 = vmul.f32 %v593, %v562
        %v595 = vmul.f32 %v594, %v593
        %v596 = vmul.f32 0.5, %v595
        %v597 = vsub.f32 1.5, %v596
        %v598 = vmul.f32 %v593, %v597
        %vm599 = vweird.f32 %v562
        %vm600 = vweird.f32 %v593
        %vm601 = vmor %vm599, %vm600
        %v602 = vsel %vm601, %v593, %v598
        %v603 = vmul.f32 %v535, %v572
        %v604 = vmul.f32 %v536, %v582
        %v605 = vmul.f32 %v537, %v592
        %v606 = vmul.f32 %v538, %v602
        %v607 = vperm.slane %v517, 0
        %v608 = vmul.f32 %v603, %v607
        %v609 = vmul.f32 %v604, %v607
        %v610 = vmul.f32 %v605, %v607
        %v611 = vmul.f32 %v606, %v607
        %v612 = vperm.slane %v518, 0
        %v613 = vadd.f32 %v608, %v612
        %v614 = vadd.f32 %v609, %v612
        %v615 = vadd.f32 %v610, %v612
        %v616 = vadd.f32 %v611, %v612
        %v617 = vpack.c.bf16 %v614, %v613
        %v618 = vpack.c.bf16 %v616, %v615
        %v619 = vld [vmem:[%s2] sm:$0xf]
        %v620 = vld [vmem:[%s2 + $0x4] sm:$0xf]
        %v621 = vld [vmem:[%s2 + $0x8] sm:$0xf]
        %v622 = vld [vmem:[%s2 + $0xc] sm:$0xf]
        %v623 = vld [vmem:[%s7 + $0x5] sm:$0x1]
        %v624 = vperm.slane %v623, 0
        %v629 = vunpack.c.l.b16 %v619
        %v630 = vunpack.c.l.b16 %v620
        %v631 = vunpack.c.l.b16 %v621
        %v632 = vunpack.c.l.b16 %v622
        %v633 = vpack.c.b16 %v630, %v629
        %v634 = vpack.c.b16 %v632, %v631
        %v638 = vsel %vm411, %v617, 0
        %v641 = vsel %vm411, %v618, 0
        %643 = vmatpush.bf16.msra.mxu0 0
        %644 = vmatpush.bf16.msra.mxu0 0
        %645 = vmatpush.bf16.msra.mxu0 0
        %646 = vmatpush.bf16.msra.mxu0 0
        %647 = vmatpush.bf16.msra.mxu0 0
        %648 = vmatpush.bf16.msra.mxu0 0
        %649 = vmatpush.bf16.msra.mxu0 %v634
        %650 = vmatpush.bf16.msra.mxu0 %v633
        %651 = vmatmul.bf16.gmra.mxu0 %v638
        %v652 = vpop.f32.mrf.mxu0
        %v653 = vadd.f32 %v624, %v652
        %v654 = vpop.f32.mrf.mxu0
        %v655 = vadd.f32 %v624, %v654
        %656 = vmatmul.bf16.gmra.mxu0 %v641
        %v657 = vpop.f32.mrf.mxu0
        %v658 = vadd.f32 %v624, %v657
        %v659 = vpop.f32.mrf.mxu0
        %v660 = vadd.f32 %v624, %v659
        %661 = vdwg.mxu0
        %v662 = vpack.c.bf16 %v655, %v653
        %v663 = vpack.c.bf16 %v660, %v658
        %v664 = vld [vmem:[%s6] sm:$0xff]
        %v665 = vld [vmem:[%s6 + $0x8] sm:$0xff]
        %v666 = vld [vmem:[%s6 + $0x10] sm:$0xff]
        %v667 = vld [vmem:[%s6 + $0x18] sm:$0xff]
        %670 = vrot.lane.b32.xlu0 %v662, 96
        %v671 = vpop.permute.xlu0 %670
        %672 = vrot.lane.b32.xlu0 %v663, 96
        %v673 = vpop.permute.xlu0 %672
        %vm674 = vcmask 64512
        %v676 = vsel %vm674, %v662, 0
        %v679 = vsel %vm674, %v663, 0
        %v682 = vsel %vm674, %v671, 0
        %v685 = vsel %vm674, %v673, 0
        %687 = vmatpush.bf16.xpose.msra.mxu0 0
        %688 = vmatpush.bf16.xpose.msra.mxu0 0
        %689 = vmatpush.bf16.xpose.msra.mxu0 0
        %690 = vmatpush.bf16.xpose.msra.mxu0 0
        %691 = vmatpush.bf16.xpose.msra.mxu0 0
        %692 = vmatpush.bf16.xpose.msra.mxu0 0
        %693 = vmatpush.bf16.xpose.msra.mxu0 %v685
        %694 = vmatpush.bf16.xpose.msra.mxu0 %v682
        %695 = vmatmul.bf16.gmra.mxu0 %v676
        %v696 = vpop.f32.mrf.mxu0
        %v697 = vadd.f32 %v664, %v696
        %v698 = vpop.f32.mrf.mxu0
        %v699 = vadd.f32 %v665, %v698
        %700 = vmatmul.bf16.gmra.mxu0 %v679
        %v701 = vpop.f32.mrf.mxu0
        %v702 = vadd.f32 %v666, %v701
        %v703 = vpop.f32.mrf.mxu0
        %v704 = vadd.f32 %v667, %v703
        %705 = vdwg.mxu0
        %v706 = vsel %vm411, %v697, -inf
        %707 = vmax.xlane.f32.xlu0 %v706
        %v708 = vpop.xlane.xlu0 %707
        %v709 = vsel %vm411, %v699, -inf
        %710 = vmax.xlane.f32.xlu0 %v709
        %v711 = vpop.xlane.xlu0 %710
        %v712 = vsel %vm411, %v702, -inf
        %713 = vmax.xlane.f32.xlu0 %v712
        %v714 = vpop.xlane.xlu0 %713
        %v715 = vsel %vm411, %v704, -inf
        %716 = vmax.xlane.f32.xlu0 %v715
        %v717 = vpop.xlane.xlu0 %716
        %v718 = vsub.f32 %v697, %v708
        %v719 = vsub.f32 %v699, %v711
        %v720 = vsub.f32 %v702, %v714
        %v721 = vsub.f32 %v704, %v717
        %v722 = vmul.f32 %v718, 1.442695
        %v723 = vpow.pop %v722
        %v724 = vmul.f32 %v719, 1.442695
        %v725 = vpow.pop %v724
        %v726 = vmul.f32 %v720, 1.442695
        %v727 = vpow.pop %v726
        %v728 = vmul.f32 %v721, 1.442695
        %v729 = vpow.pop %v728
        %v730 = vsel %vm411, %v723, 0.0
        %731 = vadd.xlane.f32.xlu0 %v730
        %v732 = vpop.xlane.xlu0 %731
        %v733 = vsel %vm411, %v725, 0.0
        %734 = vadd.xlane.f32.xlu0 %v733
        %v735 = vpop.xlane.xlu0 %734
        %v736 = vsel %vm411, %v727, 0.0
        %737 = vadd.xlane.f32.xlu0 %v736
        %v738 = vpop.xlane.xlu0 %737
        %v739 = vsel %vm411, %v729, 0.0
        %740 = vadd.xlane.f32.xlu0 %v739
        %v741 = vpop.xlane.xlu0 %740
        %v742 = vrcp.pop %v732
        %v743 = vrcp.pop %v735
        %v744 = vrcp.pop %v738
        %v745 = vrcp.pop %v741
        %v746 = vmul.f32 %v723, %v742
        %v747 = vmul.f32 %v725, %v743
        %v748 = vmul.f32 %v727, %v744
        %v749 = vmul.f32 %v729, %v745
        %v750 = vpack.c.bf16 %v747, %v746
        %v751 = vpack.c.bf16 %v749, %v748
        %752 = vrot.lane.b32.xlu0 %v662, 64
        %v753 = vpop.permute.xlu0 %752
        %754 = vrot.lane.b32.xlu0 %v663, 64
        %v755 = vpop.permute.xlu0 %754
        %v759 = vsel %vm411, %v750, 0
        %v762 = vsel %vm411, %v751, 0
        %764 = vmatpush.bf16.msra.mxu0 0
        %765 = vmatpush.bf16.msra.mxu0 0
        %766 = vmatpush.bf16.msra.mxu0 0
        %767 = vmatpush.bf16.msra.mxu0 0
        %768 = vmatpush.bf16.msra.mxu0 0
        %769 = vmatpush.bf16.msra.mxu0 0
        %770 = vmatpush.bf16.msra.mxu0 %v755
        %771 = vmatpush.bf16.msra.mxu0 %v753
        %772 = vmatmul.bf16.gmra.mxu0 %v759
        %v773 = vpop.f32.mrf.mxu0
        %v774 = vadd.f32 0.0, %v773
        %v775 = vpop.f32.mrf.mxu0
        %v776 = vadd.f32 0.0, %v775
        %777 = vmatmul.bf16.gmra.mxu0 %v762
        %v778 = vpop.f32.mrf.mxu0
        %v779 = vadd.f32 0.0, %v778
        %v780 = vpop.f32.mrf.mxu0
        %v781 = vadd.f32 0.0, %v780
        %782 = vdwg.mxu0
        %v783 = vpack.c.bf16 %v776, %v774
        %v784 = vpack.c.bf16 %v781, %v779
        %v785 = vld [vmem:[%s3] sm:$0xff]
        %v786 = vpack.c.bf16 %v785, %v785
        %s787 = scalar_lea.vmem %s6, 32
        %v788 = vld [vmem:[%s787] sm:$0xff]
        %v789 = vld [vmem:[%s787 + $0x8] sm:$0xff]
        %v790 = vld [vmem:[%s787 + $0x10] sm:$0xff]
        %v791 = vld [vmem:[%s787 + $0x18] sm:$0xff]
        %792 = vrot.lane.b32.xlu0 %v662, 120
        %v793 = vpop.permute.xlu0 %792
        %794 = vrot.lane.b32.xlu0 %v663, 120
        %v795 = vpop.permute.xlu0 %794
        %796 = vrot.lane.b32.xlu0 %v662, 88
        %v797 = vpop.permute.xlu0 %796
        %798 = vrot.lane.b32.xlu0 %v663, 88
        %v799 = vpop.permute.xlu0 %798
        %v801 = vsel %vm674, %v793, 0
        %v804 = vsel %vm674, %v795, 0
        %v807 = vsel %vm674, %v797, 0
        %v810 = vsel %vm674, %v799, 0
        %812 = vmatpush.bf16.xpose.msra.mxu0 0
        %813 = vmatpush.bf16.xpose.msra.mxu0 0
        %814 = vmatpush.bf16.xpose.msra.mxu0 0
        %815 = vmatpush.bf16.xpose.msra.mxu0 0
        %816 = vmatpush.bf16.xpose.msra.mxu0 0
        %817 = vmatpush.bf16.xpose.msra.mxu0 0
        %818 = vmatpush.bf16.xpose.msra.mxu0 %v810
        %819 = vmatpush.bf16.xpose.msra.mxu0 %v807
        %820 = vmatmul.bf16.gmra.mxu0 %v801
        %v821 = vpop.f32.mrf.mxu0
        %v822 = vadd.f32 %v788, %v821
        %v823 = vpop.f32.mrf.mxu0
        %v824 = vadd.f32 %v789, %v823
        %825 = vmatmul.bf16.gmra.mxu0 %v804
        %v826 = vpop.f32.mrf.mxu0
        %v827 = vadd.f32 %v790, %v826
        %v828 = vpop.f32.mrf.mxu0
        %v829 = vadd.f32 %v791, %v828
        %830 = vdwg.mxu0
        %v831 = vsel %vm411, %v822, -inf
        %832 = vmax.xlane.f32.xlu0 %v831
        %v833 = vpop.xlane.xlu0 %832
        %v834 = vsel %vm411, %v824, -inf
        %835 = vmax.xlane.f32.xlu0 %v834
        %v836 = vpop.xlane.xlu0 %835
        %v837 = vsel %vm411, %v827, -inf
        %838 = vmax.xlane.f32.xlu0 %v837
        %v839 = vpop.xlane.xlu0 %838
        %v840 = vsel %vm411, %v829, -inf
        %841 = vmax.xlane.f32.xlu0 %v840
        %v842 = vpop.xlane.xlu0 %841
        %v843 = vsub.f32 %v822, %v833
        %v844 = vsub.f32 %v824, %v836
        %v845 = vsub.f32 %v827, %v839
        %v846 = vsub.f32 %v829, %v842
        %v847 = vmul.f32 %v843, 1.442695
        %v848 = vpow.pop %v847
        %v849 = vmul.f32 %v844, 1.442695
        %v850 = vpow.pop %v849
        %v851 = vmul.f32 %v845, 1.442695
        %v852 = vpow.pop %v851
        %v853 = vmul.f32 %v846, 1.442695
        %v854 = vpow.pop %v853
        %v855 = vsel %vm411, %v848, 0.0
        %856 = vadd.xlane.f32.xlu0 %v855
        %v857 = vpop.xlane.xlu0 %856
        %v858 = vsel %vm411, %v850, 0.0
        %859 = vadd.xlane.f32.xlu0 %v858
        %v860 = vpop.xlane.xlu0 %859
        %v861 = vsel %vm411, %v852, 0.0
        %862 = vadd.xlane.f32.xlu0 %v861
        %v863 = vpop.xlane.xlu0 %862
        %v864 = vsel %vm411, %v854, 0.0
        %865 = vadd.xlane.f32.xlu0 %v864
        %v866 = vpop.xlane.xlu0 %865
        %v867 = vrcp.pop %v857
        %v868 = vrcp.pop %v860
        %v869 = vrcp.pop %v863
        %v870 = vrcp.pop %v866
        %v871 = vmul.f32 %v848, %v867
        %v872 = vmul.f32 %v850, %v868
        %v873 = vmul.f32 %v852, %v869
        %v874 = vmul.f32 %v854, %v870
        %v875 = vpack.c.bf16 %v872, %v871
        %v876 = vpack.c.bf16 %v874, %v873
        %877 = vrot.lane.b32.xlu0 %v662, 56
        %v878 = vpop.permute.xlu0 %877
        %879 = vrot.lane.b32.xlu0 %v663, 56
        %v880 = vpop.permute.xlu0 %879
        %v884 = vsel %vm411, %v875, 0
        %v887 = vsel %vm411, %v876, 0
        %889 = vmatpush.bf16.msra.mxu0 0
        %890 = vmatpush.bf16.msra.mxu0 0
        %891 = vmatpush.bf16.msra.mxu0 0
        %892 = vmatpush.bf16.msra.mxu0 0
        %893 = vmatpush.bf16.msra.mxu0 0
        %894 = vmatpush.bf16.msra.mxu0 0
        %895 = vmatpush.bf16.msra.mxu0 %v880
        %896 = vmatpush.bf16.msra.mxu0 %v878
        %897 = vmatmul.bf16.gmra.mxu0 %v884
        %v898 = vpop.f32.mrf.mxu0
        %v899 = vadd.f32 0.0, %v898
        %v900 = vpop.f32.mrf.mxu0
        %v901 = vadd.f32 0.0, %v900
        %902 = vmatmul.bf16.gmra.mxu0 %v887
        %v903 = vpop.f32.mrf.mxu0
        %v904 = vadd.f32 0.0, %v903
        %v905 = vpop.f32.mrf.mxu0
        %v906 = vadd.f32 0.0, %v905
        %907 = vdwg.mxu0
        %v908 = vpack.c.bf16 %v901, %v899
        %v909 = vpack.c.bf16 %v906, %v904
        %s910 = scalar_lea.vmem %s3, 8
        %v911 = vld [vmem:[%s910] sm:$0xff]
        %v912 = vpack.c.bf16 %v911, %v911
        %v914 = vsel %vm674, %v908, 0
        %v917 = vsel %vm674, %v909, 0
        %vm919 = vcmask 1043456
        %v921 = vsel %vm919, %v912, 0
        %923 = vmatpush.bf16.msra.mxu0 0
        %924 = vmatpush.bf16.msra.mxu0 0
        %925 = vmatpush.bf16.msra.mxu0 0
        %926 = vmatpush.bf16.msra.mxu0 0
        %927 = vmatpush.bf16.msra.mxu0 0
        %928 = vmatpush.bf16.msra.mxu0 0
        %929 = vmatpush.bf16.msra.mxu0 0
        %930 = vmatpush.bf16.msra.mxu0 %v921
        %931 = vmatmul.bf16.gmra.mxu0 %v914
        %v932 = vpop.f32.mrf.mxu0
        %v933 = vadd.f32 0.0, %v932
        %v934 = vpop.f32.mrf.mxu0
        %v935 = vadd.f32 0.0, %v934
        %936 = vmatmul.bf16.gmra.mxu0 %v917
        %v937 = vpop.f32.mrf.mxu0
        %v938 = vadd.f32 0.0, %v937
        %v939 = vpop.f32.mrf.mxu0
        %v940 = vadd.f32 0.0, %v939
        %941 = vdwg.mxu0
        %v943 = vsel %vm674, %v783, 0
        %v946 = vsel %vm674, %v784, 0
        %v949 = vsel %vm919, %v786, 0
        %951 = vmatpush.bf16.msra.mxu0 0
        %952 = vmatpush.bf16.msra.mxu0 0
        %953 = vmatpush.bf16.msra.mxu0 0
        %954 = vmatpush.bf16.msra.mxu0 0
        %955 = vmatpush.bf16.msra.mxu0 0
        %956 = vmatpush.bf16.msra.mxu0 0
        %957 = vmatpush.bf16.msra.mxu0 0
        %958 = vmatpush.bf16.msra.mxu0 %v949
        %959 = vmatmul.bf16.gmra.mxu0 %v943
        %v960 = vpop.f32.mrf.mxu0
        %v961 = vadd.f32 %v933, %v960
        %v962 = vpop.f32.mrf.mxu0
        %v963 = vadd.f32 %v935, %v962
        %964 = vmatmul.bf16.gmra.mxu0 %v946
        %v965 = vpop.f32.mrf.mxu0
        %v966 = vadd.f32 %v938, %v965
        %v967 = vpop.f32.mrf.mxu0
        %v968 = vadd.f32 %v940, %v967
        %969 = vdwg.mxu0
        %s970 = scalar_lea.vmem %s6, 64
        %v971 = vld [vmem:[%s970] sm:$0xff]
        %v972 = vld [vmem:[%s970 + $0x8] sm:$0xff]
        %v973 = vld [vmem:[%s970 + $0x10] sm:$0xff]
        %v974 = vld [vmem:[%s970 + $0x18] sm:$0xff]
        %975 = vrot.lane.b32.xlu0 %v662, 112
        %v976 = vpop.permute.xlu0 %975
        %977 = vrot.lane.b32.xlu0 %v663, 112
        %v978 = vpop.permute.xlu0 %977
        %979 = vrot.lane.b32.xlu0 %v662, 80
        %v980 = vpop.permute.xlu0 %979
        %981 = vrot.lane.b32.xlu0 %v663, 80
        %v982 = vpop.permute.xlu0 %981
        %v984 = vsel %vm674, %v976, 0
        %v987 = vsel %vm674, %v978, 0
        %v990 = vsel %vm674, %v980, 0
        %v993 = vsel %vm674, %v982, 0
        %995 = vmatpush.bf16.xpose.msra.mxu0 0
        %996 = vmatpush.bf16.xpose.msra.mxu0 0
        %997 = vmatpush.bf16.xpose.msra.mxu0 0
        %998 = vmatpush.bf16.xpose.msra.mxu0 0
        %999 = vmatpush.bf16.xpose.msra.mxu0 0
        %1000 = vmatpush.bf16.xpose.msra.mxu0 0
        %1001 = vmatpush.bf16.xpose.msra.mxu0 %v993
        %1002 = vmatpush.bf16.xpose.msra.mxu0 %v990
        %1003 = vmatmul.bf16.gmra.mxu0 %v984
        %v1004 = vpop.f32.mrf.mxu0
        %v1005 = vadd.f32 %v971, %v1004
        %v1006 = vpop.f32.mrf.mxu0
        %v1007 = vadd.f32 %v972, %v1006
        %1008 = vmatmul.bf16.gmra.mxu0 %v987
        %v1009 = vpop.f32.mrf.mxu0
        %v1010 = vadd.f32 %v973, %v1009
        %v1011 = vpop.f32.mrf.mxu0
        %v1012 = vadd.f32 %v974, %v1011
        %1013 = vdwg.mxu0
        %v1014 = vsel %vm411, %v1005, -inf
        %1015 = vmax.xlane.f32.xlu0 %v1014
        %v1016 = vpop.xlane.xlu0 %1015
        %v1017 = vsel %vm411, %v1007, -inf
        %1018 = vmax.xlane.f32.xlu0 %v1017
        %v1019 = vpop.xlane.xlu0 %1018
        %v1020 = vsel %vm411, %v1010, -inf
        %1021 = vmax.xlane.f32.xlu0 %v1020
        %v1022 = vpop.xlane.xlu0 %1021
        %v1023 = vsel %vm411, %v1012, -inf
        %1024 = vmax.xlane.f32.xlu0 %v1023
        %v1025 = vpop.xlane.xlu0 %1024
        %v1026 = vsub.f32 %v1005, %v1016
        %v1027 = vsub.f32 %v1007, %v1019
        %v1028 = vsub.f32 %v1010, %v1022
        %v1029 = vsub.f32 %v1012, %v1025
        %v1030 = vmul.f32 %v1026, 1.442695
        %v1031 = vpow.pop %v1030
        %v1032 = vmul.f32 %v1027, 1.442695
        %v1033 = vpow.pop %v1032
        %v1034 = vmul.f32 %v1028, 1.442695
        %v1035 = vpow.pop %v1034
        %v1036 = vmul.f32 %v1029, 1.442695
        %v1037 = vpow.pop %v1036
        %v1038 = vsel %vm411, %v1031, 0.0
        %1039 = vadd.xlane.f32.xlu0 %v1038
        %v1040 = vpop.xlane.xlu0 %1039
        %v1041 = vsel %vm411, %v1033, 0.0
        %1042 = vadd.xlane.f32.xlu0 %v1041
        %v1043 = vpop.xlane.xlu0 %1042
        %v1044 = vsel %vm411, %v1035, 0.0
        %1045 = vadd.xlane.f32.xlu0 %v1044
        %v1046 = vpop.xlane.xlu0 %1045
        %v1047 = vsel %vm411, %v1037, 0.0
        %1048 = vadd.xlane.f32.xlu0 %v1047
        %v1049 = vpop.xlane.xlu0 %1048
        %v1050 = vrcp.pop %v1040
        %v1051 = vrcp.pop %v1043
        %v1052 = vrcp.pop %v1046
        %v1053 = vrcp.pop %v1049
        %v1054 = vmul.f32 %v1031, %v1050
        %v1055 = vmul.f32 %v1033, %v1051
        %v1056 = vmul.f32 %v1035, %v1052
        %v1057 = vmul.f32 %v1037, %v1053
        %v1058 = vpack.c.bf16 %v1055, %v1054
        %v1059 = vpack.c.bf16 %v1057, %v1056
        %1060 = vrot.lane.b32.xlu0 %v662, 48
        %v1061 = vpop.permute.xlu0 %1060
        %1062 = vrot.lane.b32.xlu0 %v663, 48
        %v1063 = vpop.permute.xlu0 %1062
        %v1067 = vsel %vm411, %v1058, 0
        %v1070 = vsel %vm411, %v1059, 0
        %1072 = vmatpush.bf16.msra.mxu0 0
        %1073 = vmatpush.bf16.msra.mxu0 0
        %1074 = vmatpush.bf16.msra.mxu0 0
        %1075 = vmatpush.bf16.msra.mxu0 0
        %1076 = vmatpush.bf16.msra.mxu0 0
        %1077 = vmatpush.bf16.msra.mxu0 0
        %1078 = vmatpush.bf16.msra.mxu0 %v1063
        %1079 = vmatpush.bf16.msra.mxu0 %v1061
        %1080 = vmatmul.bf16.gmra.mxu0 %v1067
        %v1081 = vpop.f32.mrf.mxu0
        %v1082 = vadd.f32 0.0, %v1081
        %v1083 = vpop.f32.mrf.mxu0
        %v1084 = vadd.f32 0.0, %v1083
        %1085 = vmatmul.bf16.gmra.mxu0 %v1070
        %v1086 = vpop.f32.mrf.mxu0
        %v1087 = vadd.f32 0.0, %v1086
        %v1088 = vpop.f32.mrf.mxu0
        %v1089 = vadd.f32 0.0, %v1088
        %1090 = vdwg.mxu0
        %v1091 = vpack.c.bf16 %v1084, %v1082
        %v1092 = vpack.c.bf16 %v1089, %v1087
        %s1093 = scalar_lea.vmem %s3, 16
        %v1094 = vld [vmem:[%s1093] sm:$0xff]
        %v1095 = vpack.c.bf16 %v1094, %v1094
        %v1097 = vsel %vm674, %v1091, 0
        %v1100 = vsel %vm674, %v1092, 0
        %v1103 = vsel %vm919, %v1095, 0
        %1105 = vmatpush.bf16.msra.mxu0 0
        %1106 = vmatpush.bf16.msra.mxu0 0
        %1107 = vmatpush.bf16.msra.mxu0 0
        %1108 = vmatpush.bf16.msra.mxu0 0
        %1109 = vmatpush.bf16.msra.mxu0 0
        %1110 = vmatpush.bf16.msra.mxu0 0
        %1111 = vmatpush.bf16.msra.mxu0 0
        %1112 = vmatpush.bf16.msra.mxu0 %v1103
        %1113 = vmatmul.bf16.gmra.mxu0 %v1097
        %v1114 = vpop.f32.mrf.mxu0
        %v1115 = vadd.f32 0.0, %v1114
        %v1116 = vpop.f32.mrf.mxu0
        %v1117 = vadd.f32 0.0, %v1116
        %1118 = vmatmul.bf16.gmra.mxu0 %v1100
        %v1119 = vpop.f32.mrf.mxu0
        %v1120 = vadd.f32 0.0, %v1119
        %v1121 = vpop.f32.mrf.mxu0
        %v1122 = vadd.f32 0.0, %v1121
        %1123 = vdwg.mxu0
        %v1124 = vadd.f32 %v961, %v1115
        %v1125 = vadd.f32 %v963, %v1117
        %v1126 = vadd.f32 %v966, %v1120
        %v1127 = vadd.f32 %v968, %v1122
        %s1128 = scalar_lea.vmem %s6, 96
        %v1129 = vld [vmem:[%s1128] sm:$0xff]
        %v1130 = vld [vmem:[%s1128 + $0x8] sm:$0xff]
        %v1131 = vld [vmem:[%s1128 + $0x10] sm:$0xff]
        %v1132 = vld [vmem:[%s1128 + $0x18] sm:$0xff]
        %1133 = vrot.lane.b32.xlu0 %v662, 104
        %v1134 = vpop.permute.xlu0 %1133
        %1135 = vrot.lane.b32.xlu0 %v663, 104
        %v1136 = vpop.permute.xlu0 %1135
        %1137 = vrot.lane.b32.xlu0 %v662, 72
        %v1138 = vpop.permute.xlu0 %1137
        %1139 = vrot.lane.b32.xlu0 %v663, 72
        %v1140 = vpop.permute.xlu0 %1139
        %v1142 = vsel %vm674, %v1134, 0
        %v1145 = vsel %vm674, %v1136, 0
        %v1148 = vsel %vm674, %v1138, 0
        %v1151 = vsel %vm674, %v1140, 0
        %1153 = vmatpush.bf16.xpose.msra.mxu0 0
        %1154 = vmatpush.bf16.xpose.msra.mxu0 0
        %1155 = vmatpush.bf16.xpose.msra.mxu0 0
        %1156 = vmatpush.bf16.xpose.msra.mxu0 0
        %1157 = vmatpush.bf16.xpose.msra.mxu0 0
        %1158 = vmatpush.bf16.xpose.msra.mxu0 0
        %1159 = vmatpush.bf16.xpose.msra.mxu0 %v1151
        %1160 = vmatpush.bf16.xpose.msra.mxu0 %v1148
        %1161 = vmatmul.bf16.gmra.mxu0 %v1142
        %v1162 = vpop.f32.mrf.mxu0
        %v1163 = vadd.f32 %v1129, %v1162
        %v1164 = vpop.f32.mrf.mxu0
        %v1165 = vadd.f32 %v1130, %v1164
        %1166 = vmatmul.bf16.gmra.mxu0 %v1145
        %v1167 = vpop.f32.mrf.mxu0
        %v1168 = vadd.f32 %v1131, %v1167
        %v1169 = vpop.f32.mrf.mxu0
        %v1170 = vadd.f32 %v1132, %v1169
        %1171 = vdwg.mxu0
        %v1172 = vsel %vm411, %v1163, -inf
        %1173 = vmax.xlane.f32.xlu0 %v1172
        %v1174 = vpop.xlane.xlu0 %1173
        %v1175 = vsel %vm411, %v1165, -inf
        %1176 = vmax.xlane.f32.xlu0 %v1175
        %v1177 = vpop.xlane.xlu0 %1176
        %v1178 = vsel %vm411, %v1168, -inf
        %1179 = vmax.xlane.f32.xlu0 %v1178
        %v1180 = vpop.xlane.xlu0 %1179
        %v1181 = vsel %vm411, %v1170, -inf
        %1182 = vmax.xlane.f32.xlu0 %v1181
        %v1183 = vpop.xlane.xlu0 %1182
        %v1184 = vsub.f32 %v1163, %v1174
        %v1185 = vsub.f32 %v1165, %v1177
        %v1186 = vsub.f32 %v1168, %v1180
        %v1187 = vsub.f32 %v1170, %v1183
        %v1188 = vmul.f32 %v1184, 1.442695
        %v1189 = vpow.pop %v1188
        %v1190 = vmul.f32 %v1185, 1.442695
        %v1191 = vpow.pop %v1190
        %v1192 = vmul.f32 %v1186, 1.442695
        %v1193 = vpow.pop %v1192
        %v1194 = vmul.f32 %v1187, 1.442695
        %v1195 = vpow.pop %v1194
        %v1196 = vsel %vm411, %v1189, 0.0
        %1197 = vadd.xlane.f32.xlu0 %v1196
        %v1198 = vpop.xlane.xlu0 %1197
        %v1199 = vsel %vm411, %v1191, 0.0
        %1200 = vadd.xlane.f32.xlu0 %v1199
        %v1201 = vpop.xlane.xlu0 %1200
        %v1202 = vsel %vm411, %v1193, 0.0
        %1203 = vadd.xlane.f32.xlu0 %v1202
        %v1204 = vpop.xlane.xlu0 %1203
        %v1205 = vsel %vm411, %v1195, 0.0
        %1206 = vadd.xlane.f32.xlu0 %v1205
        %v1207 = vpop.xlane.xlu0 %1206
        %v1208 = vrcp.pop %v1198
        %v1209 = vrcp.pop %v1201
        %v1210 = vrcp.pop %v1204
        %v1211 = vrcp.pop %v1207
        %v1212 = vmul.f32 %v1189, %v1208
        %v1213 = vmul.f32 %v1191, %v1209
        %v1214 = vmul.f32 %v1193, %v1210
        %v1215 = vmul.f32 %v1195, %v1211
        %v1216 = vpack.c.bf16 %v1213, %v1212
        %v1217 = vpack.c.bf16 %v1215, %v1214
        %1218 = vrot.lane.b32.xlu0 %v662, 40
        %v1219 = vpop.permute.xlu0 %1218
        %1220 = vrot.lane.b32.xlu0 %v663, 40
        %v1221 = vpop.permute.xlu0 %1220
        %v1225 = vsel %vm411, %v1216, 0
        %v1228 = vsel %vm411, %v1217, 0
        %1230 = vmatpush.bf16.msra.mxu0 0
        %1231 = vmatpush.bf16.msra.mxu0 0
        %1232 = vmatpush.bf16.msra.mxu0 0
        %1233 = vmatpush.bf16.msra.mxu0 0
        %1234 = vmatpush.bf16.msra.mxu0 0
        %1235 = vmatpush.bf16.msra.mxu0 0
        %1236 = vmatpush.bf16.msra.mxu0 %v1221
        %1237 = vmatpush.bf16.msra.mxu0 %v1219
        %1238 = vmatmul.bf16.gmra.mxu0 %v1225
        %v1239 = vpop.f32.mrf.mxu0
        %v1240 = vadd.f32 0.0, %v1239
        %v1241 = vpop.f32.mrf.mxu0
        %v1242 = vadd.f32 0.0, %v1241
        %1243 = vmatmul.bf16.gmra.mxu0 %v1228
        %v1244 = vpop.f32.mrf.mxu0
        %v1245 = vadd.f32 0.0, %v1244
        %v1246 = vpop.f32.mrf.mxu0
        %v1247 = vadd.f32 0.0, %v1246
        %1248 = vdwg.mxu0
        %v1249 = vpack.c.bf16 %v1242, %v1240
        %v1250 = vpack.c.bf16 %v1247, %v1245
        %s1251 = scalar_lea.vmem %s3, 24
        %v1252 = vld [vmem:[%s1251] sm:$0xff]
        %v1253 = vpack.c.bf16 %v1252, %v1252
        %v1255 = vsel %vm674, %v1249, 0
        %v1258 = vsel %vm674, %v1250, 0
        %v1261 = vsel %vm919, %v1253, 0
        %1263 = vmatpush.bf16.msra.mxu0 0
        %1264 = vmatpush.bf16.msra.mxu0 0
        %1265 = vmatpush.bf16.msra.mxu0 0
        %1266 = vmatpush.bf16.msra.mxu0 0
        %1267 = vmatpush.bf16.msra.mxu0 0
        %1268 = vmatpush.bf16.msra.mxu0 0
        %1269 = vmatpush.bf16.msra.mxu0 0
        %1270 = vmatpush.bf16.msra.mxu0 %v1261
        %1271 = vmatmul.bf16.gmra.mxu0 %v1255
        %v1272 = vpop.f32.mrf.mxu0
        %v1273 = vadd.f32 0.0, %v1272
        %v1274 = vpop.f32.mrf.mxu0
        %v1275 = vadd.f32 0.0, %v1274
        %1276 = vmatmul.bf16.gmra.mxu0 %v1258
        %v1277 = vpop.f32.mrf.mxu0
        %v1278 = vadd.f32 0.0, %v1277
        %v1279 = vpop.f32.mrf.mxu0
        %v1280 = vadd.f32 0.0, %v1279
        %1281 = vdwg.mxu0
        %v1282 = vadd.f32 %v1124, %v1273
        %v1283 = vadd.f32 %v1125, %v1275
        %v1284 = vadd.f32 %v1126, %v1278
        %v1285 = vadd.f32 %v1127, %v1280
        %v1286 = vld [vmem:[%s7 + $0x6] sm:$0x1]
        %v1287 = vperm.slane %v1286, 0
        %v1288 = vadd.f32 %v1282, %v1287
        %v1289 = vadd.f32 %v1283, %v1287
        %v1290 = vadd.f32 %v1284, %v1287
        %v1291 = vadd.f32 %v1285, %v1287
        %v1292 = vadd.f32 %v513, %v1288
        %v1293 = vadd.f32 %v514, %v1289
        %v1294 = vadd.f32 %v515, %v1290
        %v1295 = vadd.f32 %v516, %v1291
        %v1296 = vld [vmem:[%s7 + $0x7] sm:$0x1]
        %v1297 = vld [vmem:[%s7 + $0x8] sm:$0x1]
        %v1298 = vsel %vm411, %v1292, 0.0
        %1299 = vadd.xlane.f32.xlu0 %v1298
        %v1300 = vpop.xlane.xlu0 %1299
        %v1301 = vsel %vm411, %v1293, 0.0
        %1302 = vadd.xlane.f32.xlu0 %v1301
        %v1303 = vpop.xlane.xlu0 %1302
        %v1304 = vsel %vm411, %v1294, 0.0
        %1305 = vadd.xlane.f32.xlu0 %v1304
        %v1306 = vpop.xlane.xlu0 %1305
        %v1307 = vsel %vm411, %v1295, 0.0
        %1308 = vadd.xlane.f32.xlu0 %v1307
        %v1309 = vpop.xlane.xlu0 %1308
        %v1310 = vmul.f32 %v1300, %v430
        %v1311 = vmul.f32 %v1303, %v430
        %v1312 = vmul.f32 %v1306, %v430
        %v1313 = vmul.f32 %v1309, %v430
        %v1314 = vsub.f32 %v1292, %v1310
        %v1315 = vsub.f32 %v1293, %v1311
        %v1316 = vsub.f32 %v1294, %v1312
        %v1317 = vsub.f32 %v1295, %v1313
        %v1318 = vmul.f32 %v1314, %v1314
        %v1319 = vmul.f32 %v1315, %v1315
        %v1320 = vmul.f32 %v1316, %v1316
        %v1321 = vmul.f32 %v1317, %v1317
        %v1322 = vsel %vm411, %v1318, 0.0
        %1323 = vadd.xlane.f32.xlu0 %v1322
        %v1324 = vpop.xlane.xlu0 %1323
        %v1325 = vsel %vm411, %v1319, 0.0
        %1326 = vadd.xlane.f32.xlu0 %v1325
        %v1327 = vpop.xlane.xlu0 %1326
        %v1328 = vsel %vm411, %v1320, 0.0
        %1329 = vadd.xlane.f32.xlu0 %v1328
        %v1330 = vpop.xlane.xlu0 %1329
        %v1331 = vsel %vm411, %v1321, 0.0
        %1332 = vadd.xlane.f32.xlu0 %v1331
        %v1333 = vpop.xlane.xlu0 %1332
        %v1334 = vmul.f32 %v1324, %v430
        %v1335 = vmul.f32 %v1327, %v430
        %v1336 = vmul.f32 %v1330, %v430
        %v1337 = vmul.f32 %v1333, %v430
        %v1338 = vadd.f32 %v1334, 1e-05
        %v1339 = vadd.f32 %v1335, 1e-05
        %v1340 = vadd.f32 %v1336, 1e-05
        %v1341 = vadd.f32 %v1337, 1e-05
        %v1342 = vrsqrt.pop %v1338
        %v1343 = vmul.f32 %v1342, %v1338
        %v1344 = vmul.f32 %v1343, %v1342
        %v1345 = vmul.f32 0.5, %v1344
        %v1346 = vsub.f32 1.5, %v1345
        %v1347 = vmul.f32 %v1342, %v1346
        %vm1348 = vweird.f32 %v1338
        %vm1349 = vweird.f32 %v1342
        %vm1350 = vmor %vm1348, %vm1349
        %v1351 = vsel %vm1350, %v1342, %v1347
        %v1352 = vrsqrt.pop %v1339
        %v1353 = vmul.f32 %v1352, %v1339
        %v1354 = vmul.f32 %v1353, %v1352
        %v1355 = vmul.f32 0.5, %v1354
        %v1356 = vsub.f32 1.5, %v1355
        %v1357 = vmul.f32 %v1352, %v1356
        %vm1358 = vweird.f32 %v1339
        %vm1359 = vweird.f32 %v1352
        %vm1360 = vmor %vm1358, %vm1359
        %v1361 = vsel %vm1360, %v1352, %v1357
        %v1362 = vrsqrt.pop %v1340
        %v1363 = vmul.f32 %v1362, %v1340
        %v1364 = vmul.f32 %v1363, %v1362
        %v1365 = vmul.f32 0.5, %v1364
        %v1366 = vsub.f32 1.5, %v1365
        %v1367 = vmul.f32 %v1362, %v1366
        %vm1368 = vweird.f32 %v1340
        %vm1369 = vweird.f32 %v1362
        %vm1370 = vmor %vm1368, %vm1369
        %v1371 = vsel %vm1370, %v1362, %v1367
        %v1372 = vrsqrt.pop %v1341
        %v1373 = vmul.f32 %v1372, %v1341
        %v1374 = vmul.f32 %v1373, %v1372
        %v1375 = vmul.f32 0.5, %v1374
        %v1376 = vsub.f32 1.5, %v1375
        %v1377 = vmul.f32 %v1372, %v1376
        %vm1378 = vweird.f32 %v1341
        %vm1379 = vweird.f32 %v1372
        %vm1380 = vmor %vm1378, %vm1379
        %v1381 = vsel %vm1380, %v1372, %v1377
        %v1382 = vmul.f32 %v1314, %v1351
        %v1383 = vmul.f32 %v1315, %v1361
        %v1384 = vmul.f32 %v1316, %v1371
        %v1385 = vmul.f32 %v1317, %v1381
        %v1386 = vperm.slane %v1296, 0
        %v1387 = vmul.f32 %v1382, %v1386
        %v1388 = vmul.f32 %v1383, %v1386
        %v1389 = vmul.f32 %v1384, %v1386
        %v1390 = vmul.f32 %v1385, %v1386
        %v1391 = vperm.slane %v1297, 0
        %v1392 = vadd.f32 %v1387, %v1391
        %v1393 = vadd.f32 %v1388, %v1391
        %v1394 = vadd.f32 %v1389, %v1391
        %v1395 = vadd.f32 %v1390, %v1391
        %v1396 = vpack.c.bf16 %v1393, %v1392
        %v1397 = vpack.c.bf16 %v1395, %v1394
        %v1398 = vld [vmem:[%s4] sm:$0xf]
        %v1399 = vld [vmem:[%s4 + $0x4] sm:$0xf]
        %v1400 = vld [vmem:[%s4 + $0x8] sm:$0xf]
        %v1401 = vld [vmem:[%s4 + $0xc] sm:$0xf]
        %v1402 = vld [vmem:[%s7 + $0x9] sm:$0x1]
        %v1403 = vperm.slane %v1402, 0
        %v1408 = vunpack.c.l.b16 %v1398
        %v1409 = vunpack.c.l.b16 %v1399
        %v1410 = vunpack.c.l.b16 %v1400
        %v1411 = vunpack.c.l.b16 %v1401
        %v1412 = vpack.c.b16 %v1409, %v1408
        %v1413 = vpack.c.b16 %v1411, %v1410
        %v1417 = vsel %vm411, %v1396, 0
        %v1420 = vsel %vm411, %v1397, 0
        %1422 = vmatpush.bf16.msra.mxu0 0
        %1423 = vmatpush.bf16.msra.mxu0 0
        %1424 = vmatpush.bf16.msra.mxu0 0
        %1425 = vmatpush.bf16.msra.mxu0 0
        %1426 = vmatpush.bf16.msra.mxu0 0
        %1427 = vmatpush.bf16.msra.mxu0 0
        %1428 = vmatpush.bf16.msra.mxu0 %v1413
        %1429 = vmatpush.bf16.msra.mxu0 %v1412
        %1430 = vmatmul.bf16.gmra.mxu0 %v1417
        %v1431 = vpop.f32.mrf.mxu0
        %v1432 = vadd.f32 %v1403, %v1431
        %v1433 = vpop.f32.mrf.mxu0
        %v1434 = vadd.f32 %v1403, %v1433
        %1435 = vmatmul.bf16.gmra.mxu0 %v1420
        %v1436 = vpop.f32.mrf.mxu0
        %v1437 = vadd.f32 %v1403, %v1436
        %v1438 = vpop.f32.mrf.mxu0
        %v1439 = vadd.f32 %v1403, %v1438
        %1440 = vdwg.mxu0
        %v1441 = vmul.f32 %v1432, 0.5
        %v1442 = vmul.f32 %v1434, 0.5
        %v1443 = vmul.f32 %v1437, 0.5
        %v1444 = vmul.f32 %v1439, 0.5
        %v1445 = vmul.f32 %v1432, 0.70710677
        %v1446 = vmul.f32 %v1434, 0.70710677
        %v1447 = vmul.f32 %v1437, 0.70710677
        %v1448 = vmul.f32 %v1439, 0.70710677
        %v1449 = vmul.f32 %v1445, %v1445
        %v1450 = vmin.f32 16.0, %v1449
        %v1451 = vmul.f32 %v1450, 2.1237322e-06
        %v1452 = vadd.f32 %v1451, 0.00028619796
        %v1453 = vmul.f32 %v1450, %v1452
        %v1454 = vadd.f32 %v1453, 0.0036580483
        %v1455 = vmul.f32 %v1450, %v1454
        %v1456 = vadd.f32 %v1455, 0.05243302
        %v1457 = vmul.f32 %v1450, %v1456
        %v1458 = vadd.f32 %v1457, 0.18741608
        %v1459 = vmul.f32 %v1450, %v1458
        %v1460 = vadd.f32 %v1459, 1.1283791
        %v1461 = vmul.f32 %v1445, %v1460
        %v1462 = vmul.f32 %v1450, 3.8918573e-05
        %v1463 = vadd.f32 %v1462, 0.001143296
        %v1464 = vmul.f32 %v1450, %v1463
        %v1465 = vadd.f32 %v1464, 0.014752088
        %v1466 = vmul.f32 %v1450, %v1465
        %v1467 = vadd.f32 %v1466, 0.112945676
        %v1468 = vmul.f32 %v1450, %v1467
        %v1469 = vadd.f32 %v1468, 0.4994258
        %v1470 = vmul.f32 %v1450, %v1469
        %v1471 = vadd.f32 %v1470, 1.0
        %v1472 = vrcp.pop %v1471
        %v1473 = vmul.f32 %v1471, %v1472
        %v1474 = vsub.f32 1.0, %v1473
        %v1475 = vmul.f32 %v1472, %v1474
        %v1476 = vadd.f32 %v1472, %v1475
        %vm1477 = vweird.f32 %v1471
        %vm1478 = vweird.f32 %v1472
        %vm1479 = vmor %vm1477, %vm1478
        %v1480 = vsel %vm1479, %v1472, %v1476
        %v1481 = vand.u32 2147483647, %v1471
        %vm1482 = vcmp.eq.f32.partialorder %v1481, 8.507059e+37
        %v1483 = vand.u32 %v1471, 2147483648
        %v1484 = vor.u32 1.1754944e-38, %v1483
        %v1485 = vsel %vm1482, %v1484, %v1480
        %v1486 = vmul.f32 %v1461, %v1485
        %v1487 = vmin.f32 %v1486, 1.0
        %v1488 = vmax.f32 %v1487, -1.0
        %v1489 = vmul.f32 %v1446, %v1446
        %v1490 = vmin.f32 16.0, %v1489
        %v1491 = vmul.f32 %v1490, 2.1237322e-06
        %v1492 = vadd.f32 %v1491, 0.00028619796
        %v1493 = vmul.f32 %v1490, %v1492
        %v1494 = vadd.f32 %v1493, 0.0036580483
        %v1495 = vmul.f32 %v1490, %v1494
        %v1496 = vadd.f32 %v1495, 0.05243302
        %v1497 = vmul.f32 %v1490, %v1496
        %v1498 = vadd.f32 %v1497, 0.18741608
        %v1499 = vmul.f32 %v1490, %v1498
        %v1500 = vadd.f32 %v1499, 1.1283791
        %v1501 = vmul.f32 %v1446, %v1500
        %v1502 = vmul.f32 %v1490, 3.8918573e-05
        %v1503 = vadd.f32 %v1502, 0.001143296
        %v1504 = vmul.f32 %v1490, %v1503
        %v1505 = vadd.f32 %v1504, 0.014752088
        %v1506 = vmul.f32 %v1490, %v1505
        %v1507 = vadd.f32 %v1506, 0.112945676
        %v1508 = vmul.f32 %v1490, %v1507
        %v1509 = vadd.f32 %v1508, 0.4994258
        %v1510 = vmul.f32 %v1490, %v1509
        %v1511 = vadd.f32 %v1510, 1.0
        %v1512 = vrcp.pop %v1511
        %v1513 = vmul.f32 %v1511, %v1512
        %v1514 = vsub.f32 1.0, %v1513
        %v1515 = vmul.f32 %v1512, %v1514
        %v1516 = vadd.f32 %v1512, %v1515
        %vm1517 = vweird.f32 %v1511
        %vm1518 = vweird.f32 %v1512
        %vm1519 = vmor %vm1517, %vm1518
        %v1520 = vsel %vm1519, %v1512, %v1516
        %v1521 = vand.u32 2147483647, %v1511
        %vm1522 = vcmp.eq.f32.partialorder %v1521, 8.507059e+37
        %v1523 = vand.u32 %v1511, 2147483648
        %v1524 = vor.u32 1.1754944e-38, %v1523
        %v1525 = vsel %vm1522, %v1524, %v1520
        %v1526 = vmul.f32 %v1501, %v1525
        %v1527 = vmin.f32 %v1526, 1.0
        %v1528 = vmax.f32 %v1527, -1.0
        %v1529 = vmul.f32 %v1447, %v1447
        %v1530 = vmin.f32 16.0, %v1529
        %v1531 = vmul.f32 %v1530, 2.1237322e-06
        %v1532 = vadd.f32 %v1531, 0.00028619796
        %v1533 = vmul.f32 %v1530, %v1532
        %v1534 = vadd.f32 %v1533, 0.0036580483
        %v1535 = vmul.f32 %v1530, %v1534
        %v1536 = vadd.f32 %v1535, 0.05243302
        %v1537 = vmul.f32 %v1530, %v1536
        %v1538 = vadd.f32 %v1537, 0.18741608
        %v1539 = vmul.f32 %v1530, %v1538
        %v1540 = vadd.f32 %v1539, 1.1283791
        %v1541 = vmul.f32 %v1447, %v1540
        %v1542 = vmul.f32 %v1530, 3.8918573e-05
        %v1543 = vadd.f32 %v1542, 0.001143296
        %v1544 = vmul.f32 %v1530, %v1543
        %v1545 = vadd.f32 %v1544, 0.014752088
        %v1546 = vmul.f32 %v1530, %v1545
        %v1547 = vadd.f32 %v1546, 0.112945676
        %v1548 = vmul.f32 %v1530, %v1547
        %v1549 = vadd.f32 %v1548, 0.4994258
        %v1550 = vmul.f32 %v1530, %v1549
        %v1551 = vadd.f32 %v1550, 1.0
        %v1552 = vrcp.pop %v1551
        %v1553 = vmul.f32 %v1551, %v1552
        %v1554 = vsub.f32 1.0, %v1553
        %v1555 = vmul.f32 %v1552, %v1554
        %v1556 = vadd.f32 %v1552, %v1555
        %vm1557 = vweird.f32 %v1551
        %vm1558 = vweird.f32 %v1552
        %vm1559 = vmor %vm1557, %vm1558
        %v1560 = vsel %vm1559, %v1552, %v1556
        %v1561 = vand.u32 2147483647, %v1551
        %vm1562 = vcmp.eq.f32.partialorder %v1561, 8.507059e+37
        %v1563 = vand.u32 %v1551, 2147483648
        %v1564 = vor.u32 1.1754944e-38, %v1563
        %v1565 = vsel %vm1562, %v1564, %v1560
        %v1566 = vmul.f32 %v1541, %v1565
        %v1567 = vmin.f32 %v1566, 1.0
        %v1568 = vmax.f32 %v1567, -1.0
        %v1569 = vmul.f32 %v1448, %v1448
        %v1570 = vmin.f32 16.0, %v1569
        %v1571 = vmul.f32 %v1570, 2.1237322e-06
        %v1572 = vadd.f32 %v1571, 0.00028619796
        %v1573 = vmul.f32 %v1570, %v1572
        %v1574 = vadd.f32 %v1573, 0.0036580483
        %v1575 = vmul.f32 %v1570, %v1574
        %v1576 = vadd.f32 %v1575, 0.05243302
        %v1577 = vmul.f32 %v1570, %v1576
        %v1578 = vadd.f32 %v1577, 0.18741608
        %v1579 = vmul.f32 %v1570, %v1578
        %v1580 = vadd.f32 %v1579, 1.1283791
        %v1581 = vmul.f32 %v1448, %v1580
        %v1582 = vmul.f32 %v1570, 3.8918573e-05
        %v1583 = vadd.f32 %v1582, 0.001143296
        %v1584 = vmul.f32 %v1570, %v1583
        %v1585 = vadd.f32 %v1584, 0.014752088
        %v1586 = vmul.f32 %v1570, %v1585
        %v1587 = vadd.f32 %v1586, 0.112945676
        %v1588 = vmul.f32 %v1570, %v1587
        %v1589 = vadd.f32 %v1588, 0.4994258
        %v1590 = vmul.f32 %v1570, %v1589
        %v1591 = vadd.f32 %v1590, 1.0
        %v1592 = vrcp.pop %v1591
        %v1593 = vmul.f32 %v1591, %v1592
        %v1594 = vsub.f32 1.0, %v1593
        %v1595 = vmul.f32 %v1592, %v1594
        %v1596 = vadd.f32 %v1592, %v1595
        %vm1597 = vweird.f32 %v1591
        %vm1598 = vweird.f32 %v1592
        %vm1599 = vmor %vm1597, %vm1598
        %v1600 = vsel %vm1599, %v1592, %v1596
        %v1601 = vand.u32 2147483647, %v1591
        %vm1602 = vcmp.eq.f32.partialorder %v1601, 8.507059e+37
        %v1603 = vand.u32 %v1591, 2147483648
        %v1604 = vor.u32 1.1754944e-38, %v1603
        %v1605 = vsel %vm1602, %v1604, %v1600
        %v1606 = vmul.f32 %v1581, %v1605
        %v1607 = vmin.f32 %v1606, 1.0
        %v1608 = vmax.f32 %v1607, -1.0
        %v1609 = vadd.f32 %v1488, 1.0
        %v1610 = vadd.f32 %v1528, 1.0
        %v1611 = vadd.f32 %v1568, 1.0
        %v1612 = vadd.f32 %v1608, 1.0
        %v1613 = vmul.f32 %v1441, %v1609
        %v1614 = vmul.f32 %v1442, %v1610
        %v1615 = vmul.f32 %v1443, %v1611
        %v1616 = vmul.f32 %v1444, %v1612
        %v1617 = vpack.c.bf16 %v1614, %v1613
        %v1618 = vpack.c.bf16 %v1616, %v1615
        %v1619 = vld [vmem:[%s5] sm:$0xf]
        %v1620 = vld [vmem:[%s5 + $0x4] sm:$0xf]
        %v1621 = vld [vmem:[%s5 + $0x8] sm:$0xf]
        %v1622 = vld [vmem:[%s5 + $0xc] sm:$0xf]
        %v1623 = vld [vmem:[%s5 + $0x10] sm:$0xf]
        %v1624 = vld [vmem:[%s5 + $0x14] sm:$0xf]
        %v1625 = vld [vmem:[%s5 + $0x18] sm:$0xf]
        %v1626 = vld [vmem:[%s5 + $0x1c] sm:$0xf]
        %v1627 = vld [vmem:[%s5 + $0x20] sm:$0xf]
        %v1628 = vld [vmem:[%s5 + $0x24] sm:$0xf]
        %v1629 = vld [vmem:[%s5 + $0x28] sm:$0xf]
        %v1630 = vld [vmem:[%s5 + $0x2c] sm:$0xf]
        %v1631 = vld [vmem:[%s5 + $0x30] sm:$0xf]
        %v1632 = vld [vmem:[%s5 + $0x34] sm:$0xf]
        %v1633 = vld [vmem:[%s5 + $0x38] sm:$0xf]
        %v1634 = vld [vmem:[%s5 + $0x3c] sm:$0xf]
        %v1635 = vld [vmem:[%s7 + $0xa] sm:$0x1]
        %v1636 = vperm.slane %v1635, 0
        %v1653 = vunpack.c.l.b16 %v1619
        %v1654 = vunpack.c.l.b16 %v1620
        %v1655 = vunpack.c.l.b16 %v1621
        %v1656 = vunpack.c.l.b16 %v1622
        %v1657 = vunpack.c.l.b16 %v1623
        %v1658 = vunpack.c.l.b16 %v1624
        %v1659 = vunpack.c.l.b16 %v1625
        %v1660 = vunpack.c.l.b16 %v1626
        %v1661 = vunpack.c.l.b16 %v1627
        %v1662 = vunpack.c.l.b16 %v1628
        %v1663 = vunpack.c.l.b16 %v1629
        %v1664 = vunpack.c.l.b16 %v1630
        %v1665 = vunpack.c.l.b16 %v1631
        %v1666 = vunpack.c.l.b16 %v1632
        %v1667 = vunpack.c.l.b16 %v1633
        %v1668 = vunpack.c.l.b16 %v1634
        %v1669 = vpack.c.b16 %v1654, %v1653
        %v1670 = vpack.c.b16 %v1656, %v1655
        %v1671 = vpack.c.b16 %v1658, %v1657
        %v1672 = vpack.c.b16 %v1660, %v1659
        %v1673 = vpack.c.b16 %v1662, %v1661
        %v1674 = vpack.c.b16 %v1664, %v1663
        %v1675 = vpack.c.b16 %v1666, %v1665
        %v1676 = vpack.c.b16 %v1668, %v1667
        %1685 = vmatpush.bf16.msra.mxu0 %v1676
        %1686 = vmatpush.bf16.msra.mxu0 %v1675
        %1687 = vmatpush.bf16.msra.mxu0 %v1674
        %1688 = vmatpush.bf16.msra.mxu0 %v1673
        %1689 = vmatpush.bf16.msra.mxu0 %v1672
        %1690 = vmatpush.bf16.msra.mxu0 %v1671
        %1691 = vmatpush.bf16.msra.mxu0 %v1670
        %1692 = vmatpush.bf16.msra.mxu0 %v1669
        %1693 = vmatmul.bf16.gmra.mxu0 %v1617
        %v1694 = vpop.f32.mrf.mxu0
        %v1695 = vadd.f32 %v1636, %v1694
        %v1696 = vpop.f32.mrf.mxu0
        %v1697 = vadd.f32 %v1636, %v1696
        %1698 = vmatmul.bf16.gmra.mxu0 %v1618
        %v1699 = vpop.f32.mrf.mxu0
        %v1700 = vadd.f32 %v1636, %v1699
        %v1701 = vpop.f32.mrf.mxu0
        %v1702 = vadd.f32 %v1636, %v1701
        %1703 = vdwg.mxu0
        %v1704 = vadd.f32 %v1292, %v1695
        %v1705 = vadd.f32 %v1293, %v1697
        %v1706 = vadd.f32 %v1294, %v1700
        %v1707 = vadd.f32 %v1295, %v1702
        %v1708 = vld [vmem:[%s7 + $0xb] sm:$0x1]
        %v1709 = vld [vmem:[%s7 + $0xc] sm:$0x1]
        %v1710 = vsel %vm411, %v1704, 0.0
        %1711 = vadd.xlane.f32.xlu0 %v1710
        %v1712 = vpop.xlane.xlu0 %1711
        %v1713 = vsel %vm411, %v1705, 0.0
        %1714 = vadd.xlane.f32.xlu0 %v1713
        %v1715 = vpop.xlane.xlu0 %1714
        %v1716 = vsel %vm411, %v1706, 0.0
        %1717 = vadd.xlane.f32.xlu0 %v1716
        %v1718 = vpop.xlane.xlu0 %1717
        %v1719 = vsel %vm411, %v1707, 0.0
        %1720 = vadd.xlane.f32.xlu0 %v1719
        %v1721 = vpop.xlane.xlu0 %1720
        %v1722 = vmul.f32 %v1712, %v430
        %v1723 = vmul.f32 %v1715, %v430
        %v1724 = vmul.f32 %v1718, %v430
        %v1725 = vmul.f32 %v1721, %v430
        %v1726 = vsub.f32 %v1704, %v1722
        %v1727 = vsub.f32 %v1705, %v1723
        %v1728 = vsub.f32 %v1706, %v1724
        %v1729 = vsub.f32 %v1707, %v1725
        %v1730 = vmul.f32 %v1726, %v1726
        %v1731 = vmul.f32 %v1727, %v1727
        %v1732 = vmul.f32 %v1728, %v1728
        %v1733 = vmul.f32 %v1729, %v1729
        %v1734 = vsel %vm411, %v1730, 0.0
        %1735 = vadd.xlane.f32.xlu0 %v1734
        %v1736 = vpop.xlane.xlu0 %1735
        %v1737 = vsel %vm411, %v1731, 0.0
        %1738 = vadd.xlane.f32.xlu0 %v1737
        %v1739 = vpop.xlane.xlu0 %1738
        %v1740 = vsel %vm411, %v1732, 0.0
        %1741 = vadd.xlane.f32.xlu0 %v1740
        %v1742 = vpop.xlane.xlu0 %1741
        %v1743 = vsel %vm411, %v1733, 0.0
        %1744 = vadd.xlane.f32.xlu0 %v1743
        %v1745 = vpop.xlane.xlu0 %1744
        %v1746 = vmul.f32 %v1736, %v430
        %v1747 = vmul.f32 %v1739, %v430
        %v1748 = vmul.f32 %v1742, %v430
        %v1749 = vmul.f32 %v1745, %v430
        %v1750 = vadd.f32 %v1746, 1e-05
        %v1751 = vadd.f32 %v1747, 1e-05
        %v1752 = vadd.f32 %v1748, 1e-05
        %v1753 = vadd.f32 %v1749, 1e-05
        %v1754 = vrsqrt.pop %v1750
        %v1755 = vmul.f32 %v1754, %v1750
        %v1756 = vmul.f32 %v1755, %v1754
        %v1757 = vmul.f32 0.5, %v1756
        %v1758 = vsub.f32 1.5, %v1757
        %v1759 = vmul.f32 %v1754, %v1758
        %vm1760 = vweird.f32 %v1750
        %vm1761 = vweird.f32 %v1754
        %vm1762 = vmor %vm1760, %vm1761
        %v1763 = vsel %vm1762, %v1754, %v1759
        %v1764 = vrsqrt.pop %v1751
        %v1765 = vmul.f32 %v1764, %v1751
        %v1766 = vmul.f32 %v1765, %v1764
        %v1767 = vmul.f32 0.5, %v1766
        %v1768 = vsub.f32 1.5, %v1767
        %v1769 = vmul.f32 %v1764, %v1768
        %vm1770 = vweird.f32 %v1751
        %vm1771 = vweird.f32 %v1764
        %vm1772 = vmor %vm1770, %vm1771
        %v1773 = vsel %vm1772, %v1764, %v1769
        %v1774 = vrsqrt.pop %v1752
        %v1775 = vmul.f32 %v1774, %v1752
        %v1776 = vmul.f32 %v1775, %v1774
        %v1777 = vmul.f32 0.5, %v1776
        %v1778 = vsub.f32 1.5, %v1777
        %v1779 = vmul.f32 %v1774, %v1778
        %vm1780 = vweird.f32 %v1752
        %vm1781 = vweird.f32 %v1774
        %vm1782 = vmor %vm1780, %vm1781
        %v1783 = vsel %vm1782, %v1774, %v1779
        %v1784 = vrsqrt.pop %v1753
        %v1785 = vmul.f32 %v1784, %v1753
        %v1786 = vmul.f32 %v1785, %v1784
        %v1787 = vmul.f32 0.5, %v1786
        %v1788 = vsub.f32 1.5, %v1787
        %v1789 = vmul.f32 %v1784, %v1788
        %vm1790 = vweird.f32 %v1753
        %vm1791 = vweird.f32 %v1784
        %vm1792 = vmor %vm1790, %vm1791
        %v1793 = vsel %vm1792, %v1784, %v1789
        %v1794 = vmul.f32 %v1726, %v1763
        %v1795 = vmul.f32 %v1727, %v1773
        %v1796 = vmul.f32 %v1728, %v1783
        %v1797 = vmul.f32 %v1729, %v1793
        %v1798 = vperm.slane %v1708, 0
        %v1799 = vmul.f32 %v1794, %v1798
        %v1800 = vmul.f32 %v1795, %v1798
        %v1801 = vmul.f32 %v1796, %v1798
        %v1802 = vmul.f32 %v1797, %v1798
        %v1803 = vperm.slane %v1709, 0
        %v1804 = vadd.f32 %v1799, %v1803
        %v1805 = vadd.f32 %v1800, %v1803
        %v1806 = vadd.f32 %v1801, %v1803
        %v1807 = vadd.f32 %v1802, %v1803
        %1808 = vst.msk [vmem:[%s299] sm:$0xff] %vm411, %v1804
        %1809 = vst.msk [vmem:[%s299 + $0x8] sm:$0xff] %vm411, %v1805
        %1810 = vst.msk [vmem:[%s299 + $0x10] sm:$0xff] %vm411, %v1806
        %1811 = vst.msk [vmem:[%s299 + $0x18] sm:$0xff] %vm411, %v1807
        %s1812 = sand.u32 %s203, 1
        %s1813 = scalar_lea.sflag [#allocation3], %s1812
        %s1814 = sand.u32 %s203, 1
        %s1815 = smul.addr %s1814, 32
        %s1816 = scalar_lea.vmem [#allocation2], %s1815
        // Predicated region
        $region53: #{video_swin_forward.1} parent=51 // pred_check
          %p1817 = pneg %p213
        $region54: #{video_swin_forward.1} parent=51 // pred_check_branch
          %1819 = sbr.rel (%p1817) target = $region56
        $region55: #{video_swin_forward.1} parent=51 // pred_region
          %s1820 = smul.u32 4, %s22
          %1822 = vsyncadd %s1813, 0
          %s1823 = smul.addr %s1820, 8
          %s1824 = scalar_lea.hbm %s8, %s1823
          %s1825 = sshll.u32 %s1816, 4
          %s1826 = int_to_ptr.vmem [resolvable:$true] %s1825
          %s1827 = sshll.u32 %s1824, 4
          %s1828 = int_to_ptr.hbm [resolvable:$true] %s1827
          %1833 = dma.vmem_to_hbm [thread:$0]  %s1826, 512, %s1828, %s1813, 128, 128, 8
        $region56: #{video_swin_forward.1} parent=51 // pred_fallthru
          _
      $region52: #{video_swin_forward.1} parent=5 // pred_fallthru
        _
      %p1834 = scmp.le.s32.totalorder 2, %s17
      // Predicated region
      $region57: #{video_swin_forward.1} parent=5 // pred_check
        %p1835 = pneg %p1834
      $region58: #{video_swin_forward.1} parent=5 // pred_check_branch
        %1837 = sbr.rel (%p1835) target = $region60
      $region59: #{video_swin_forward.1} parent=5 // pred_region
        %s1838 = ssub.s32 %s17, 2
        // Predicated region
        $region61: #{video_swin_forward.1} parent=59 // pred_check
          %p1839 = pneg %p219
        $region62: #{video_swin_forward.1} parent=59 // pred_check_branch
          %1841 = sbr.rel (%p1839) target = $region64
        $region63: #{video_swin_forward.1} parent=59 // pred_region
          %s1842 = sand.u32 %s204, 1
          %s1843 = scalar_lea.sflag [#allocation3], %s1842
          %s1844 = sand.u32 %s204, 1
          %s1845 = smul.addr %s1844, 32
          %s1846 = scalar_lea.vmem [#allocation2], %s1845
          %1848 = dma.done %s1843, 512
        $region64: #{video_swin_forward.1} parent=59 // pred_fallthru
          _
      $region60: #{video_swin_forward.1} parent=5 // pred_fallthru
        _
    $region6: #{video_swin_forward.1} parent=1 // loop_footer
      %s21 = sadd.s32 1, %s17
    $region7: #{video_swin_forward.1} parent=1 // loop_footer_branch
      %16 = sbr.rel target = $region3
    $region8: #{video_swin_forward.1} parent=1 // loop_exit
      _
    %1849 = vsyncpa [#allocation3], 1
    %s1850 = scalar_lea.sflag [#allocation3], 1
    %1851 = vsyncpa %s1850, 1

</llo_original>
